<compile_context>
chip_gen: v7x
topology: tpu7x:2x2x1
jax: 0.10.0
libtpu: 0.0.40
codegen_flags: <defaults>
</compile_context>

<pallas_src>
import functools
import math

import jax
import jax.numpy as jnp
from jax.experimental import pallas as pl
from jax.experimental.pallas import tpu as pltpu


# ------------------------------ fused kernel --------------------------------

def _student_kernel(
    # per-batch input (grid axis 0 selects the batch element)
    patches_ref,            # (1, S, CPP) f32 ; rows 0,1 are zero (token slots)
    # prologue params (constant across grid)
    tok_pos_ref,            # (S, H) f32  [cls+pos0 ; dist+pos1 ; pos_patch+patch_b]
    patch_w_ref,            # (CPP, H) bf16
    # per-layer params (grid axis 1 selects the layer; leading block dim == 1)
    ln1_g_ref, ln1_b_ref,   # (1, 1, H) f32
    wqkv_ref,               # (1, NH, H, 3*dh) bf16   fused per-head Q|K|V
    bqkv_ref,               # (1, NH, 1, 3*dh) f32
    wo_ref,                 # (1, NH, dh, H) bf16
    bo_ref,                 # (1, 1, H) f32
    ln2_g_ref, ln2_b_ref,   # (1, 1, H) f32
    w1_ref, b1_ref,         # (1, H, FF) bf16, (1, 1, FF) f32
    w2_ref, b2_ref,         # (1, FF, H) bf16, (1, 1, H) f32
    # epilogue params (constant across grid)
    lnf_g_ref, lnf_b_ref,   # (1, H) f32
    cls_w_ref, cls_b_ref,   # (H, NL) bf16, (1, NL) f32
    # outputs
    logits_ref,             # (1, 1, NL) f32
    hidden_ref,             # (1, S, H) f32
    # scratch (persists across grid iterations)
    h_ref,                  # (S, H) f32  residual-stream carry across layers
    *, S, H, NH, dh, eps, scale):
    f32 = jnp.float32
    bf16 = jnp.bfloat16
    l = pl.program_id(1)
    n_l = pl.num_programs(1)

    def layer_norm(x, g, b):
        mean = jnp.mean(x, axis=-1, keepdims=True)
        var = jnp.mean(jnp.square(x - mean), axis=-1, keepdims=True)
        return (x - mean) * jax.lax.rsqrt(var + eps) * g + b

    # ---- prologue (layer 0 only): patch embedding + token/pos assembly ----
    # Conv2d(C, H, kernel=P, stride=P) was rewritten as a matmul; the two extra
    # zero rows in `patches` are the CLS / distillation slots, whose embeddings
    # (plus positional embeddings and the conv bias) arrive via tok_pos.
    @pl.when(l == 0)
    def _():
        patches = patches_ref[0].astype(bf16)                       # (S, CPP)
        pe = jnp.dot(patches, patch_w_ref[...],
                     preferred_element_type=f32)                    # (S, H)
        h_ref[...] = pe + tok_pos_ref[...]
    # TODO(synk): dropout layers are identity in eval mode, omitted.

    h = h_ref[...]                                                   # (S, H) f32

    # -------------------- one transformer layer per grid step ----------------
    # pre-LN multi-head self-attention; heads batched on a leading axis.
    x2 = layer_norm(h, ln1_g_ref[0], ln1_b_ref[0])                   # (S, H)
    x2b = jnp.broadcast_to(x2.astype(bf16)[None], (NH, S, H))        # (NH, S, H)
    qkv = jnp.einsum('nsh,nhd->nsd', x2b, wqkv_ref[0],
                     preferred_element_type=f32) + bqkv_ref[0]       # (NH, S, 3dh)
    q = qkv[:, :, 0:dh].astype(bf16)
    k = qkv[:, :, dh:2 * dh].astype(bf16)
    v = qkv[:, :, 2 * dh:3 * dh].astype(bf16)

    s = jnp.einsum('nsd,ntd->nst', q, k,
                   preferred_element_type=f32) * scale               # (NH, S, S)
    s = s - jnp.max(s, axis=-1, keepdims=True)
    p = jnp.exp(s)
    p = p * pl.reciprocal(jnp.sum(p, axis=-1, keepdims=True), approx=True)

    ctx = jnp.einsum('nst,ntd->nsd', p.astype(bf16), v,
                     preferred_element_type=f32)                     # (NH, S, dh)
    # Head merge folded into the output projection: sum_h ctx_h @ Wo[h].
    attn = jnp.einsum('nsd,ndh->nsh', ctx.astype(bf16), wo_ref[0],
                      preferred_element_type=f32)                    # (NH, S, H)
    h = h + jnp.sum(attn, axis=0) + bo_ref[0]

    # pre-LN MLP with tanh-approximate GELU (EUP path).
    x2 = layer_norm(h, ln2_g_ref[0], ln2_b_ref[0])
    mid = jnp.dot(x2.astype(bf16), w1_ref[0],
                  preferred_element_type=f32) + b1_ref[0]            # (S, FF)
    mid = jax.nn.gelu(mid, approximate=True)
    mlp = jnp.dot(mid.astype(bf16), w2_ref[0],
                  preferred_element_type=f32) + b2_ref[0]            # (S, H)
    h = h + mlp
    h_ref[...] = h                                                   # carry

    # ---- epilogue (last layer only): final LN + classifier on CLS token ----
    @pl.when(l == n_l - 1)
    def _():
        hfin = layer_norm(h, lnf_g_ref[...], lnf_b_ref[...])
        hidden_ref[0] = hfin.astype(hidden_ref.dtype)
        pooled = hfin[0:1, :]                                        # CLS row
        logits = jnp.dot(pooled.astype(bf16), cls_w_ref[...],
                         preferred_element_type=f32) + cls_b_ref[...]
        logits_ref[0] = logits.astype(logits_ref.dtype)


# ----------------------------- model / params -------------------------------

def init_params(key, cfg):
    """Synthetic weights, already converted to the kernel layout (head-major,
    bf16 matmul slabs, folded token/positional/bias slab)."""
    C, P = cfg["num_channels"], cfg["patch_size"]
    H, L, FF, NL = (cfg["hidden"], cfg["num_layers"], cfg["intermediate"],
                    cfg["num_labels"])
    NH = cfg["num_heads"]
    dh = H // NH
    NP = (cfg["image_size"] // P) ** 2
    S = NP + 2                                   # CLS + distillation token
    CPP = C * P * P
    std = 0.02
    f32, bf16 = jnp.float32, jnp.bfloat16

    def nrm(k, shape):
        return std * jax.random.normal(k, shape, dtype=f32)

    keys = iter(jax.random.split(key, 8 + 8 * L))

    patch_w = nrm(next(keys), (CPP, H))
    patch_b = jnp.zeros((H,), f32)
    cls_token = nrm(next(keys), (1, H))
    dist_token = nrm(next(keys), (1, H))
    pos_emb = nrm(next(keys), (S, H))
    # TODO(synk): with a real conv checkpoint, patch_w must be reshaped from the
    # (H, C, P, P) conv kernel in the same (C, Ph, Pw) order as the host im2col.

    # Fold CLS/dist token embeddings, positional embeddings and the patch-embed
    # bias into one additive (S, H) slab (rows 0/1 of the patch matmul input are
    # zero, so patch_b is only added to the patch rows).
    tok_pos = jnp.concatenate(
        [cls_token + pos_emb[0:1],
         dist_token + pos_emb[1:2],
         pos_emb[2:] + patch_b[None, :]], axis=0)                    # (S, H)

    def head_cols(w):        # (H, H) -> (NH, H, dh): split output cols per head
        return w.reshape(H, NH, dh).transpose(1, 0, 2)

    wqkv, bqkv, wo, bo = [], [], [], []
    w1, b1, w2, b2 = [], [], [], []
    ln1_g, ln1_b, ln2_g, ln2_b = [], [], [], []
    for _ in range(L):
        wq, wk, wv = (nrm(next(keys), (H, H)) for _ in range(3))
        bq = bk = bv = jnp.zeros((H,), f32)
        wqkv.append(jnp.concatenate(
            [head_cols(wq), head_cols(wk), head_cols(wv)], axis=-1))  # (NH,H,3dh)
        bqkv.append(jnp.concatenate(
            [bq.reshape(NH, 1, dh), bk.reshape(NH, 1, dh),
             bv.reshape(NH, 1, dh)], axis=-1))                        # (NH,1,3dh)
        wo.append(nrm(next(keys), (H, H)).reshape(NH, dh, H))         # (NH,dh,H)
        bo.append(jnp.zeros((1, H), f32))
        w1.append(nrm(next(keys), (H, FF)))
        b1.append(jnp.zeros((1, FF), f32))
        w2.append(nrm(next(keys), (FF, H)))
        b2.append(jnp.zeros((1, H), f32))
        ln1_g.append(jnp.ones((1, H), f32)); ln1_b.append(jnp.zeros((1, H), f32))
        ln2_g.append(jnp.ones((1, H), f32)); ln2_b.append(jnp.zeros((1, H), f32))

    return dict(
        tok_pos=tok_pos,
        patch_w=patch_w.astype(bf16),
        ln1_g=jnp.stack(ln1_g), ln1_b=jnp.stack(ln1_b),
        wqkv=jnp.stack(wqkv).astype(bf16), bqkv=jnp.stack(bqkv),
        wo=jnp.stack(wo).astype(bf16), bo=jnp.stack(bo),
        ln2_g=jnp.stack(ln2_g), ln2_b=jnp.stack(ln2_b),
        w1=jnp.stack(w1).astype(bf16), b1=jnp.stack(b1),
        w2=jnp.stack(w2).astype(bf16), b2=jnp.stack(b2),
        lnf_g=jnp.ones((1, H), f32), lnf_b=jnp.zeros((1, H), f32),
        cls_w=nrm(next(keys), (H, NL)).astype(bf16),
        cls_b=jnp.zeros((1, NL), f32),
    )


def student_forward(params, pixel_values, cfg):
    """Returns (logits, last_hidden_states) like Student.forward (eval mode)."""
    B, C, Himg, Wimg = pixel_values.shape
    P = cfg["patch_size"]
    hp, wp = Himg // P, Wimg // P
    NP = hp * wp
    H = cfg["hidden"]
    NH = cfg["num_heads"]
    dh = H // NH
    L = cfg["num_layers"]
    NL = cfg["num_labels"]
    eps = cfg["eps"]
    S = NP + 2
    CPP = C * P * P

    # One-off im2col: Conv2d(C, H, kernel=P, stride=P) == per-patch matmul.
    x = pixel_values.reshape(B, C, hp, P, wp, P)
    patches = x.transpose(0, 2, 4, 1, 3, 5).reshape(B, NP, CPP)
    # Two leading zero rows per image are the CLS / distillation token slots.
    patches = jnp.pad(patches, ((0, 0), (2, 0), (0, 0)))             # (B, S, CPP)

    kernel = functools.partial(
        _student_kernel, S=S, H=H, NH=NH, dh=dh, eps=eps,
        scale=1.0 / math.sqrt(dh))

    def const_spec(shape):                     # same block for every grid step
        n = len(shape)
        return pl.BlockSpec(tuple(shape), lambda b, l: (0,) * n)

    def layer_spec(shape):                     # leading dim is L -> block = 1 layer
        n = len(shape)
        return pl.BlockSpec((1,) + tuple(shape[1:]),
                            lambda b, l: (l,) + (0,) * (n - 1))

    args_and_specs = [
        (patches, pl.BlockSpec((1, S, CPP), lambda b, l: (b, 0, 0))),
        (params["tok_pos"], const_spec((S, H))),
        (params["patch_w"], const_spec((CPP, H))),
        (params["ln1_g"], layer_spec(params["ln1_g"].shape)),
        (params["ln1_b"], layer_spec(params["ln1_b"].shape)),
        (params["wqkv"], layer_spec(params["wqkv"].shape)),
        (params["bqkv"], layer_spec(params["bqkv"].shape)),
        (params["wo"], layer_spec(params["wo"].shape)),
        (params["bo"], layer_spec(params["bo"].shape)),
        (params["ln2_g"], layer_spec(params["ln2_g"].shape)),
        (params["ln2_b"], layer_spec(params["ln2_b"].shape)),
        (params["w1"], layer_spec(params["w1"].shape)),
        (params["b1"], layer_spec(params["b1"].shape)),
        (params["w2"], layer_spec(params["w2"].shape)),
        (params["b2"], layer_spec(params["b2"].shape)),
        (params["lnf_g"], const_spec((1, H))),
        (params["lnf_b"], const_spec((1, H))),
        (params["cls_w"], const_spec((H, NL))),
        (params["cls_b"], const_spec((1, NL))),
    ]
    inputs = [a for a, _ in args_and_specs]
    in_specs = [s for _, s in args_and_specs]

    logits, hidden = pl.pallas_call(
        kernel,
        out_shape=(jax.ShapeDtypeStruct((B, 1, NL), jnp.float32),
                   jax.ShapeDtypeStruct((B, S, H), jnp.float32)),
        grid=(B, L),
        in_specs=in_specs,
        out_specs=(pl.BlockSpec((1, 1, NL), lambda b, l: (b, 0, 0)),
                   pl.BlockSpec((1, S, H), lambda b, l: (b, 0, 0))),
        scratch_shapes=[pltpu.VMEM((S, H), jnp.float32)],
        compiler_params=pltpu.CompilerParams(
            dimension_semantics=("parallel", "arbitrary")),
    )(*inputs)
    return logits.reshape(B, NL), hidden


# ---------------------------------- main -------------------------------------

if __name__ == "__main__":
    cfg = dict(
        num_channels=3, patch_size=16, image_size=32,
        hidden=32, num_layers=2, num_heads=2, intermediate=64,
        num_labels=5, eps=1e-12,
    )
    key = jax.random.PRNGKey(0)
    pkey, xkey = jax.random.split(key)
    params = init_params(pkey, cfg)
    pixel_values = jax.random.normal(
        xkey, (2, cfg["num_channels"], cfg["image_size"], cfg["image_size"]),
        dtype=jnp.float32)

    fwd = jax.jit(lambda p, x: student_forward(p, x, cfg))
    logits, last_hidden = fwd(params, pixel_values)
    logits, last_hidden = jax.block_until_ready((logits, last_hidden))

    NP = (cfg["image_size"] // cfg["patch_size"]) ** 2
    assert logits.shape == (2, cfg["num_labels"])
    assert last_hidden.shape == (2, NP + 2, cfg["hidden"])
    assert bool(jnp.all(jnp.isfinite(logits)))
    assert bool(jnp.all(jnp.isfinite(last_hidden)))
    print("KERNEL_OK")
</pallas_src>

<mosaic_0001>
module attributes {stable_mosaic.version = 11 : i64} {
  func.func @_student_kernel(%arg0: i32, %arg1: i32, %arg2: memref<1x6x768xf32, #tpu.memory_space<vmem>>, %arg3: memref<6x32xf32, #tpu.memory_space<vmem>>, %arg4: memref<768x32xbf16, #tpu.memory_space<vmem>>, %arg5: memref<1x1x32xf32, #tpu.memory_space<vmem>>, %arg6: memref<1x1x32xf32, #tpu.memory_space<vmem>>, %arg7: memref<1x2x32x48xbf16, #tpu.memory_space<vmem>>, %arg8: memref<1x2x1x48xf32, #tpu.memory_space<vmem>>, %arg9: memref<1x2x16x32xbf16, #tpu.memory_space<vmem>>, %arg10: memref<1x1x32xf32, #tpu.memory_space<vmem>>, %arg11: memref<1x1x32xf32, #tpu.memory_space<vmem>>, %arg12: memref<1x1x32xf32, #tpu.memory_space<vmem>>, %arg13: memref<1x32x64xbf16, #tpu.memory_space<vmem>>, %arg14: memref<1x1x64xf32, #tpu.memory_space<vmem>>, %arg15: memref<1x64x32xbf16, #tpu.memory_space<vmem>>, %arg16: memref<1x1x32xf32, #tpu.memory_space<vmem>>, %arg17: memref<1x32xf32, #tpu.memory_space<vmem>>, %arg18: memref<1x32xf32, #tpu.memory_space<vmem>>, %arg19: memref<32x5xbf16, #tpu.memory_space<vmem>>, %arg20: memref<1x5xf32, #tpu.memory_space<vmem>>, %arg21: memref<1x1x5xf32, #tpu.memory_space<vmem>>, %arg22: memref<1x6x32xf32, #tpu.memory_space<vmem>>, %arg23: memref<6x32xf32, #tpu.memory_space<vmem>>) attributes {dimension_semantics = [#tpu.dimension_semantics<parallel>, #tpu.dimension_semantics<arbitrary>], iteration_bounds = array<i64: 2, 2>, scalar_prefetch = 0 : i64, scratch_operands = 1 : i64, tpu.core_type = #tpu.core_type<tc>, window_params = [{transform_indices = @transform_0, window_bounds = array<i64: 1, 6, 768>}, {pipeline_mode = #tpu.pipeline_mode<synchronous>, transform_indices = @transform_1, window_bounds = array<i64: 6, 32>}, {pipeline_mode = #tpu.pipeline_mode<synchronous>, transform_indices = @transform_2, window_bounds = array<i64: 768, 32>}, {transform_indices = @transform_3, window_bounds = array<i64: 1, 1, 32>}, {transform_indices = @transform_4, window_bounds = array<i64: 1, 1, 32>}, {transform_indices = @transform_5, window_bounds = array<i64: 1, 2, 32, 48>}, {transform_indices = @transform_6, window_bounds = array<i64: 1, 2, 1, 48>}, {transform_indices = @transform_7, window_bounds = array<i64: 1, 2, 16, 32>}, {transform_indices = @transform_8, window_bounds = array<i64: 1, 1, 32>}, {transform_indices = @transform_9, window_bounds = array<i64: 1, 1, 32>}, {transform_indices = @transform_10, window_bounds = array<i64: 1, 1, 32>}, {transform_indices = @transform_11, window_bounds = array<i64: 1, 32, 64>}, {transform_indices = @transform_12, window_bounds = array<i64: 1, 1, 64>}, {transform_indices = @transform_13, window_bounds = array<i64: 1, 64, 32>}, {transform_indices = @transform_14, window_bounds = array<i64: 1, 1, 32>}, {pipeline_mode = #tpu.pipeline_mode<synchronous>, transform_indices = @transform_15, window_bounds = array<i64: 1, 32>}, {pipeline_mode = #tpu.pipeline_mode<synchronous>, transform_indices = @transform_16, window_bounds = array<i64: 1, 32>}, {pipeline_mode = #tpu.pipeline_mode<synchronous>, transform_indices = @transform_17, window_bounds = array<i64: 32, 5>}, {pipeline_mode = #tpu.pipeline_mode<synchronous>, transform_indices = @transform_18, window_bounds = array<i64: 1, 5>}, {transform_indices = @transform_19, window_bounds = array<i64: 1, 1, 5>}, {transform_indices = @transform_20, window_bounds = array<i64: 1, 6, 32>}]} {
    %c0_i32 = arith.constant 0 : i32
    %0 = arith.cmpi eq, %arg1, %c0_i32 : i32
    %1 = arith.extui %0 : i1 to i32
    %c0_i32_0 = arith.constant 0 : i32
    %2 = arith.cmpi ne, %1, %c0_i32_0 : i32
    scf.if %2 {
      %c0_67 = arith.constant 0 : index
      %c0_68 = arith.constant 0 : index
      %c0_69 = arith.constant 0 : index
      %132 = vector.load %arg2[%c0_67, %c0_68, %c0_69] : memref<1x6x768xf32, #tpu.memory_space<vmem>>, vector<1x6x768xf32>
      %133 = vector.shape_cast %132 : vector<1x6x768xf32> to vector<6x768xf32>
      %134 = arith.truncf %133 : vector<6x768xf32> to vector<6x768xbf16>
      %c0_70 = arith.constant 0 : index
      %c0_71 = arith.constant 0 : index
      %135 = vector.load %arg4[%c0_70, %c0_71] : memref<768x32xbf16, #tpu.memory_space<vmem>>, vector<768x32xbf16>
      %cst_72 = arith.constant dense<0.000000e+00> : vector<6x32xf32>
      %136 = tpu.matmul %134, %135, %cst_72 {dimension_numbers = #tpu.dot_dimension_numbers<[1], [0], [0], [1], [0, 0, 1, 1], [], []>} : vector<6x768xbf16>, vector<768x32xbf16>, vector<6x32xf32> -> vector<6x32xf32>
      %c0_73 = arith.constant 0 : index
      %c0_74 = arith.constant 0 : index
      %137 = vector.load %arg3[%c0_73, %c0_74] : memref<6x32xf32, #tpu.memory_space<vmem>>, vector<6x32xf32>
      %138 = arith.addf %136, %137 : vector<6x32xf32>
      %c0_75 = arith.constant 0 : index
      %c0_76 = arith.constant 0 : index
      %139 = vector.load %arg23[%c0_75, %c0_76] : memref<6x32xf32, #tpu.memory_space<vmem>>, vector<6x32xf32>
      tpu.vector_store %arg23[%c0_75, %c0_76], %138 {strides = array<i32>} : memref<6x32xf32, #tpu.memory_space<vmem>>, vector<6x32xf32>,
    } else {
    }
    %c0 = arith.constant 0 : index
    %c0_1 = arith.constant 0 : index
    %3 = vector.load %arg23[%c0, %c0_1] : memref<6x32xf32, #tpu.memory_space<vmem>>, vector<6x32xf32>
    %c0_2 = arith.constant 0 : index
    %c0_3 = arith.constant 0 : index
    %c0_4 = arith.constant 0 : index
    %4 = vector.load %arg5[%c0_2, %c0_3, %c0_4] : memref<1x1x32xf32, #tpu.memory_space<vmem>>, vector<1x1x32xf32>
    %5 = vector.shape_cast %4 : vector<1x1x32xf32> to vector<1x32xf32>
    %c0_5 = arith.constant 0 : index
    %c0_6 = arith.constant 0 : index
    %c0_7 = arith.constant 0 : index
    %6 = vector.load %arg6[%c0_5, %c0_6, %c0_7] : memref<1x1x32xf32, #tpu.memory_space<vmem>>, vector<1x1x32xf32>
    %7 = vector.shape_cast %6 : vector<1x1x32xf32> to vector<1x32xf32>
    %cst = arith.constant dense<0.000000e+00> : vector<6xf32>
    %8 = vector.multi_reduction <add>, %3, %cst [1] : vector<6x32xf32> to vector<6xf32>
    %9 = vector.shape_cast %8 : vector<6xf32> to vector<6x1xf32>
    %cst_8 = arith.constant 3.200000e+01 : f32
    %10 = vector.broadcast %cst_8 : f32 to vector<6x1xf32>
    %11 = arith.divf %9, %10 : vector<6x1xf32>
    %12 = vector.broadcast %11 : vector<6x1xf32> to vector<6x32xf32>
    %13 = arith.subf %3, %12 : vector<6x32xf32>
    %14 = arith.mulf %13, %13 : vector<6x32xf32>
    %cst_9 = arith.constant dense<0.000000e+00> : vector<6xf32>
    %15 = vector.multi_reduction <add>, %14, %cst_9 [1] : vector<6x32xf32> to vector<6xf32>
    %16 = vector.shape_cast %15 : vector<6xf32> to vector<6x1xf32>
    %cst_10 = arith.constant 3.200000e+01 : f32
    %17 = vector.broadcast %cst_10 : f32 to vector<6x1xf32>
    %18 = arith.divf %16, %17 : vector<6x1xf32>
    %19 = vector.broadcast %11 : vector<6x1xf32> to vector<6x32xf32>
    %20 = arith.subf %3, %19 : vector<6x32xf32>
    %cst_11 = arith.constant 9.99999996E-13 : f32
    %21 = vector.broadcast %cst_11 : f32 to vector<6x1xf32>
    %22 = arith.addf %18, %21 : vector<6x1xf32>
    %23 = math.rsqrt %22 : vector<6x1xf32>
    %24 = vector.broadcast %23 : vector<6x1xf32> to vector<6x32xf32>
    %25 = arith.mulf %20, %24 : vector<6x32xf32>
    %26 = vector.broadcast %5 : vector<1x32xf32> to vector<6x32xf32>
    %27 = arith.mulf %25, %26 : vector<6x32xf32>
    %28 = vector.broadcast %7 : vector<1x32xf32> to vector<6x32xf32>
    %29 = arith.addf %27, %28 : vector<6x32xf32>
    %30 = arith.truncf %29 : vector<6x32xf32> to vector<6x32xbf16>
    %31 = vector.shape_cast %30 : vector<6x32xbf16> to vector<1x6x32xbf16>
    %32 = vector.shape_cast %31 : vector<1x6x32xbf16> to vector<1x6x32xbf16>
    %33 = vector.broadcast %32 : vector<1x6x32xbf16> to vector<2x6x32xbf16>
    %c0_12 = arith.constant 0 : index
    %c0_13 = arith.constant 0 : index
    %c0_14 = arith.constant 0 : index
    %c0_15 = arith.constant 0 : index
    %34 = vector.load %arg7[%c0_12, %c0_13, %c0_14, %c0_15] : memref<1x2x32x48xbf16, #tpu.memory_space<vmem>>, vector<1x2x32x48xbf16>
    %35 = vector.shape_cast %34 : vector<1x2x32x48xbf16> to vector<2x32x48xbf16>
    "tpu.trace_start"() <{level = 10 : i32, message = "nsh,nhd->nsd"}> : () -> ()
    %cst_16 = arith.constant dense<0.000000e+00> : vector<2x6x48xf32>
    %36 = tpu.matmul %33, %35, %cst_16 {dimension_numbers = #tpu.dot_dimension_numbers<[2], [1], [1], [2], [0, 0, 0, 1, 1, 2], [0], [0]>} : vector<2x6x32xbf16>, vector<2x32x48xbf16>, vector<2x6x48xf32> -> vector<2x6x48xf32>
    "tpu.trace_stop"() : () -> ()
    %c0_17 = arith.constant 0 : index
    %c0_18 = arith.constant 0 : index
    %c0_19 = arith.constant 0 : index
    %c0_20 = arith.constant 0 : index
    %37 = vector.load %arg8[%c0_17, %c0_18, %c0_19, %c0_20] : memref<1x2x1x48xf32, #tpu.memory_space<vmem>>, vector<1x2x1x48xf32>
    %38 = vector.shape_cast %37 : vector<1x2x1x48xf32> to vector<2x1x48xf32>
    %39 = vector.broadcast %38 : vector<2x1x48xf32> to vector<2x6x48xf32>
    %40 = arith.addf %36, %39 : vector<2x6x48xf32>
    %41 = vector.extract_strided_slice %40 {offsets = [0, 0, 0], sizes = [2, 6, 16], strides = [1, 1, 1]} : vector<2x6x48xf32> to vector<2x6x16xf32>
    %42 = arith.truncf %41 : vector<2x6x16xf32> to vector<2x6x16xbf16>
    %43 = vector.extract_strided_slice %40 {offsets = [0, 0, 16], sizes = [2, 6, 16], strides = [1, 1, 1]} : vector<2x6x48xf32> to vector<2x6x16xf32>
    %44 = arith.truncf %43 : vector<2x6x16xf32> to vector<2x6x16xbf16>
    %45 = vector.extract_strided_slice %40 {offsets = [0, 0, 32], sizes = [2, 6, 16], strides = [1, 1, 1]} : vector<2x6x48xf32> to vector<2x6x16xf32>
    %46 = arith.truncf %45 : vector<2x6x16xf32> to vector<2x6x16xbf16>
    "tpu.trace_start"() <{level = 10 : i32, message = "nsd,ntd->nst"}> : () -> ()
    %cst_21 = arith.constant dense<0.000000e+00> : vector<2x6x6xf32>
    %47 = tpu.matmul %42, %44, %cst_21 {dimension_numbers = #tpu.dot_dimension_numbers<[2], [2], [1], [1], [0, 0, 0, 1, 1, 1], [0], [0]>} : vector<2x6x16xbf16>, vector<2x6x16xbf16>, vector<2x6x6xf32> -> vector<2x6x6xf32>
    "tpu.trace_stop"() : () -> ()
    %cst_22 = arith.constant 2.500000e-01 : f32
    %48 = vector.broadcast %cst_22 : f32 to vector<2x6x6xf32>
    %49 = arith.mulf %47, %48 : vector<2x6x6xf32>
    %cst_23 = arith.constant dense<0xFF800000> : vector<2x6xf32>
    %50 = vector.multi_reduction <maximumf>, %49, %cst_23 [2] : vector<2x6x6xf32> to vector<2x6xf32>
    %51 = vector.shape_cast %50 : vector<2x6xf32> to vector<2x6x1xf32>
    %52 = vector.broadcast %51 : vector<2x6x1xf32> to vector<2x6x6xf32>
    %53 = arith.subf %49, %52 : vector<2x6x6xf32>
    %54 = math.exp %53 : vector<2x6x6xf32>
    %cst_24 = arith.constant dense<0.000000e+00> : vector<2x6xf32>
    %55 = vector.multi_reduction <add>, %54, %cst_24 [2] : vector<2x6x6xf32> to vector<2x6xf32>
    %56 = vector.shape_cast %55 : vector<2x6xf32> to vector<2x6x1xf32>
    %57 = tpu.reciprocal %56 {approx = true} : vector<2x6x1xf32> -> vector<2x6x1xf32>
    %58 = vector.broadcast %57 : vector<2x6x1xf32> to vector<2x6x6xf32>
    %59 = arith.mulf %54, %58 : vector<2x6x6xf32>
    %60 = arith.truncf %59 : vector<2x6x6xf32> to vector<2x6x6xbf16>
    "tpu.trace_start"() <{level = 10 : i32, message = "nst,ntd->nsd"}> : () -> ()
    %cst_25 = arith.constant dense<0.000000e+00> : vector<2x6x16xf32>
    %61 = tpu.matmul %60, %46, %cst_25 {dimension_numbers = #tpu.dot_dimension_numbers<[2], [1], [1], [2], [0, 0, 0, 1, 1, 2], [0], [0]>} : vector<2x6x6xbf16>, vector<2x6x16xbf16>, vector<2x6x16xf32> -> vector<2x6x16xf32>
    "tpu.trace_stop"() : () -> ()
    %62 = arith.truncf %61 : vector<2x6x16xf32> to vector<2x6x16xbf16>
    %c0_26 = arith.constant 0 : index
    %c0_27 = arith.constant 0 : index
    %c0_28 = arith.constant 0 : index
    %c0_29 = arith.constant 0 : index
    %63 = vector.load %arg9[%c0_26, %c0_27, %c0_28, %c0_29] : memref<1x2x16x32xbf16, #tpu.memory_space<vmem>>, vector<1x2x16x32xbf16>
    %64 = vector.shape_cast %63 : vector<1x2x16x32xbf16> to vector<2x16x32xbf16>
    "tpu.trace_start"() <{level = 10 : i32, message = "nsd,ndh->nsh"}> : () -> ()
    %cst_30 = arith.constant dense<0.000000e+00> : vector<2x6x32xf32>
    %65 = tpu.matmul %62, %64, %cst_30 {dimension_numbers = #tpu.dot_dimension_numbers<[2], [1], [1], [2], [0, 0, 0, 1, 1, 2], [0], [0]>} : vector<2x6x16xbf16>, vector<2x16x32xbf16>, vector<2x6x32xf32> -> vector<2x6x32xf32>
    "tpu.trace_stop"() : () -> ()
    %cst_31 = arith.constant dense<0.000000e+00> : vector<6x32xf32>
    %66 = vector.multi_reduction <add>, %65, %cst_31 [0] : vector<2x6x32xf32> to vector<6x32xf32>
    %67 = arith.addf %3, %66 : vector<6x32xf32>
    %c0_32 = arith.constant 0 : index
    %c0_33 = arith.constant 0 : index
    %c0_34 = arith.constant 0 : index
    %68 = vector.load %arg10[%c0_32, %c0_33, %c0_34] : memref<1x1x32xf32, #tpu.memory_space<vmem>>, vector<1x1x32xf32>
    %69 = vector.shape_cast %68 : vector<1x1x32xf32> to vector<1x32xf32>
    %70 = vector.broadcast %69 : vector<1x32xf32> to vector<6x32xf32>
    %71 = arith.addf %67, %70 : vector<6x32xf32>
    %c0_35 = arith.constant 0 : index
    %c0_36 = arith.constant 0 : index
    %c0_37 = arith.constant 0 : index
    %72 = vector.load %arg11[%c0_35, %c0_36, %c0_37] : memref<1x1x32xf32, #tpu.memory_space<vmem>>, vector<1x1x32xf32>
    %73 = vector.shape_cast %72 : vector<1x1x32xf32> to vector<1x32xf32>
    %c0_38 = arith.constant 0 : index
    %c0_39 = arith.constant 0 : index
    %c0_40 = arith.constant 0 : index
    %74 = vector.load %arg12[%c0_38, %c0_39, %c0_40] : memref<1x1x32xf32, #tpu.memory_space<vmem>>, vector<1x1x32xf32>
    %75 = vector.shape_cast %74 : vector<1x1x32xf32> to vector<1x32xf32>
    %cst_41 = arith.constant dense<0.000000e+00> : vector<6xf32>
    %76 = vector.multi_reduction <add>, %71, %cst_41 [1] : vector<6x32xf32> to vector<6xf32>
    %77 = vector.shape_cast %76 : vector<6xf32> to vector<6x1xf32>
    %cst_42 = arith.constant 3.200000e+01 : f32
    %78 = vector.broadcast %cst_42 : f32 to vector<6x1xf32>
    %79 = arith.divf %77, %78 : vector<6x1xf32>
    %80 = vector.broadcast %79 : vector<6x1xf32> to vector<6x32xf32>
    %81 = arith.subf %71, %80 : vector<6x32xf32>
    %82 = arith.mulf %81, %81 : vector<6x32xf32>
    %cst_43 = arith.constant dense<0.000000e+00> : vector<6xf32>
    %83 = vector.multi_reduction <add>, %82, %cst_43 [1] : vector<6x32xf32> to vector<6xf32>
    %84 = vector.shape_cast %83 : vector<6xf32> to vector<6x1xf32>
    %cst_44 = arith.constant 3.200000e+01 : f32
    %85 = vector.broadcast %cst_44 : f32 to vector<6x1xf32>
    %86 = arith.divf %84, %85 : vector<6x1xf32>
    %87 = vector.broadcast %79 : vector<6x1xf32> to vector<6x32xf32>
    %88 = arith.subf %71, %87 : vector<6x32xf32>
    %cst_45 = arith.constant 9.99999996E-13 : f32
    %89 = vector.broadcast %cst_45 : f32 to vector<6x1xf32>
    %90 = arith.addf %86, %89 : vector<6x1xf32>
    %91 = math.rsqrt %90 : vector<6x1xf32>
    %92 = vector.broadcast %91 : vector<6x1xf32> to vector<6x32xf32>
    %93 = arith.mulf %88, %92 : vector<6x32xf32>
    %94 = vector.broadcast %73 : vector<1x32xf32> to vector<6x32xf32>
    %95 = arith.mulf %93, %94 : vector<6x32xf32>
    %96 = vector.broadcast %75 : vector<1x32xf32> to vector<6x32xf32>
    %97 = arith.addf %95, %96 : vector<6x32xf32>
    %98 = arith.truncf %97 : vector<6x32xf32> to vector<6x32xbf16>
    %c0_46 = arith.constant 0 : index
    %c0_47 = arith.constant 0 : index
    %c0_48 = arith.constant 0 : index
    %99 = vector.load %arg13[%c0_46, %c0_47, %c0_48] : memref<1x32x64xbf16, #tpu.memory_space<vmem>>, vector<1x32x64xbf16>
    %100 = vector.shape_cast %99 : vector<1x32x64xbf16> to vector<32x64xbf16>
    %cst_49 = arith.constant dense<0.000000e+00> : vector<6x64xf32>
    %101 = tpu.matmul %98, %100, %cst_49 {dimension_numbers = #tpu.dot_dimension_numbers<[1], [0], [0], [1], [0, 0, 1, 1], [], []>} : vector<6x32xbf16>, vector<32x64xbf16>, vector<6x64xf32> -> vector<6x64xf32>
    %c0_50 = arith.constant 0 : index
    %c0_51 = arith.constant 0 : index
    %c0_52 = arith.constant 0 : index
    %102 = vector.load %arg14[%c0_50, %c0_51, %c0_52] : memref<1x1x64xf32, #tpu.memory_space<vmem>>, vector<1x1x64xf32>
    %103 = vector.shape_cast %102 : vector<1x1x64xf32> to vector<1x64xf32>
    %104 = vector.broadcast %103 : vector<1x64xf32> to vector<6x64xf32>
    %105 = arith.addf %101, %104 : vector<6x64xf32>
    %106 = arith.mulf %105, %105 : vector<6x64xf32>
    %107 = arith.mulf %105, %106 : vector<6x64xf32>
    %cst_53 = arith.constant 4.471500e-02 : f32
    %108 = vector.broadcast %cst_53 : f32 to vector<6x64xf32>
    %109 = arith.mulf %108, %107 : vector<6x64xf32>
    %110 = arith.addf %105, %109 : vector<6x64xf32>
    %cst_54 = arith.constant 0.797884583 : f32
    %111 = vector.broadcast %cst_54 : f32 to vector<6x64xf32>
    %112 = arith.mulf %111, %110 : vector<6x64xf32>
    %113 = math.tanh %112 : vector<6x64xf32>
    %cst_55 = arith.constant 1.000000e+00 : f32
    %114 = vector.broadcast %cst_55 : f32 to vector<6x64xf32>
    %115 = arith.addf %114, %113 : vector<6x64xf32>
    %cst_56 = arith.constant 5.000000e-01 : f32
    %116 = vector.broadcast %cst_56 : f32 to vector<6x64xf32>
    %117 = arith.mulf %116, %115 : vector<6x64xf32>
    %118 = arith.mulf %105, %117 : vector<6x64xf32>
    %119 = arith.truncf %118 : vector<6x64xf32> to vector<6x64xbf16>
    %c0_57 = arith.constant 0 : index
    %c0_58 = arith.constant 0 : index
    %c0_59 = arith.constant 0 : index
    %120 = vector.load %arg15[%c0_57, %c0_58, %c0_59] : memref<1x64x32xbf16, #tpu.memory_space<vmem>>, vector<1x64x32xbf16>
    %121 = vector.shape_cast %120 : vector<1x64x32xbf16> to vector<64x32xbf16>
    %cst_60 = arith.constant dense<0.000000e+00> : vector<6x32xf32>
    %122 = tpu.matmul %119, %121, %cst_60 {dimension_numbers = #tpu.dot_dimension_numbers<[1], [0], [0], [1], [0, 0, 1, 1], [], []>} : vector<6x64xbf16>, vector<64x32xbf16>, vector<6x32xf32> -> vector<6x32xf32>
    %c0_61 = arith.constant 0 : index
    %c0_62 = arith.constant 0 : index
    %c0_63 = arith.constant 0 : index
    %123 = vector.load %arg16[%c0_61, %c0_62, %c0_63] : memref<1x1x32xf32, #tpu.memory_space<vmem>>, vector<1x1x32xf32>
    %124 = vector.shape_cast %123 : vector<1x1x32xf32> to vector<1x32xf32>
    %125 = vector.broadcast %124 : vector<1x32xf32> to vector<6x32xf32>
    %126 = arith.addf %122, %125 : vector<6x32xf32>
    %127 = arith.addf %71, %126 : vector<6x32xf32>
    %c0_64 = arith.constant 0 : index
    %c0_65 = arith.constant 0 : index
    %128 = vector.load %arg23[%c0_64, %c0_65] : memref<6x32xf32, #tpu.memory_space<vmem>>, vector<6x32xf32>
    tpu.vector_store %arg23[%c0_64, %c0_65], %127 {strides = array<i32>} : memref<6x32xf32, #tpu.memory_space<vmem>>, vector<6x32xf32>,
    %c1_i32 = arith.constant 1 : i32
    %129 = arith.cmpi eq, %arg1, %c1_i32 : i32
    %130 = arith.extui %129 : i1 to i32
    %c0_i32_66 = arith.constant 0 : i32
    %131 = arith.cmpi ne, %130, %c0_i32_66 : i32
    scf.if %131 {
      %c0_67 = arith.constant 0 : index
      %c0_68 = arith.constant 0 : index
      %132 = vector.load %arg17[%c0_67, %c0_68] : memref<1x32xf32, #tpu.memory_space<vmem>>, vector<1x32xf32>
      %c0_69 = arith.constant 0 : index
      %c0_70 = arith.constant 0 : index
      %133 = vector.load %arg18[%c0_69, %c0_70] : memref<1x32xf32, #tpu.memory_space<vmem>>, vector<1x32xf32>
      %cst_71 = arith.constant dense<0.000000e+00> : vector<6xf32>
      %134 = vector.multi_reduction <add>, %127, %cst_71 [1] : vector<6x32xf32> to vector<6xf32>
      %135 = vector.shape_cast %134 : vector<6xf32> to vector<6x1xf32>
      %cst_72 = arith.constant 3.200000e+01 : f32
      %136 = vector.broadcast %cst_72 : f32 to vector<6x1xf32>
      %137 = arith.divf %135, %136 : vector<6x1xf32>
      %138 = vector.broadcast %137 : vector<6x1xf32> to vector<6x32xf32>
      %139 = arith.subf %127, %138 : vector<6x32xf32>
      %140 = arith.mulf %139, %139 : vector<6x32xf32>
      %cst_73 = arith.constant dense<0.000000e+00> : vector<6xf32>
      %141 = vector.multi_reduction <add>, %140, %cst_73 [1] : vector<6x32xf32> to vector<6xf32>
      %142 = vector.shape_cast %141 : vector<6xf32> to vector<6x1xf32>
      %cst_74 = arith.constant 3.200000e+01 : f32
      %143 = vector.broadcast %cst_74 : f32 to vector<6x1xf32>
      %144 = arith.divf %142, %143 : vector<6x1xf32>
      %145 = vector.broadcast %137 : vector<6x1xf32> to vector<6x32xf32>
      %146 = arith.subf %127, %145 : vector<6x32xf32>
      %cst_75 = arith.constant 9.99999996E-13 : f32
      %147 = vector.broadcast %cst_75 : f32 to vector<6x1xf32>
      %148 = arith.addf %144, %147 : vector<6x1xf32>
      %149 = math.rsqrt %148 : vector<6x1xf32>
      %150 = vector.broadcast %149 : vector<6x1xf32> to vector<6x32xf32>
      %151 = arith.mulf %146, %150 : vector<6x32xf32>
      %152 = vector.broadcast %132 : vector<1x32xf32> to vector<6x32xf32>
      %153 = arith.mulf %151, %152 : vector<6x32xf32>
      %154 = vector.broadcast %133 : vector<1x32xf32> to vector<6x32xf32>
      %155 = arith.addf %153, %154 : vector<6x32xf32>
      %c0_76 = arith.constant 0 : index
      %c0_77 = arith.constant 0 : index
      %c0_78 = arith.constant 0 : index
      %156 = vector.load %arg22[%c0_76, %c0_77, %c0_78] : memref<1x6x32xf32, #tpu.memory_space<vmem>>, vector<1x6x32xf32>
      %157 = vector.shape_cast %156 : vector<1x6x32xf32> to vector<6x32xf32>
      %158 = vector.shape_cast %155 : vector<6x32xf32> to vector<1x6x32xf32>
      tpu.vector_store %arg22[%c0_76, %c0_77, %c0_78], %158 {strides = array<i32>} : memref<1x6x32xf32, #tpu.memory_space<vmem>>, vector<1x6x32xf32>,
      %159 = vector.extract_strided_slice %155 {offsets = [0, 0], sizes = [1, 32], strides = [1, 1]} : vector<6x32xf32> to vector<1x32xf32>
      %160 = arith.truncf %159 : vector<1x32xf32> to vector<1x32xbf16>
      %c0_79 = arith.constant 0 : index
      %c0_80 = arith.constant 0 : index
      %161 = vector.load %arg19[%c0_79, %c0_80] : memref<32x5xbf16, #tpu.memory_space<vmem>>, vector<32x5xbf16>
      %cst_81 = arith.constant dense<0.000000e+00> : vector<1x5xf32>
      %162 = tpu.matmul %160, %161, %cst_81 {dimension_numbers = #tpu.dot_dimension_numbers<[1], [0], [0], [1], [0, 0, 1, 1], [], []>} : vector<1x32xbf16>, vector<32x5xbf16>, vector<1x5xf32> -> vector<1x5xf32>
      %c0_82 = arith.constant 0 : index
      %c0_83 = arith.constant 0 : index
      %163 = vector.load %arg20[%c0_82, %c0_83] : memref<1x5xf32, #tpu.memory_space<vmem>>, vector<1x5xf32>
      %164 = arith.addf %162, %163 : vector<1x5xf32>
      %c0_84 = arith.constant 0 : index
      %c0_85 = arith.constant 0 : index
      %c0_86 = arith.constant 0 : index
      %165 = vector.load %arg21[%c0_84, %c0_85, %c0_86] : memref<1x1x5xf32, #tpu.memory_space<vmem>>, vector<1x1x5xf32>
      %166 = vector.shape_cast %165 : vector<1x1x5xf32> to vector<1x5xf32>
      %167 = vector.shape_cast %164 : vector<1x5xf32> to vector<1x1x5xf32>
      tpu.vector_store %arg21[%c0_84, %c0_85, %c0_86], %167 {strides = array<i32>} : memref<1x1x5xf32, #tpu.memory_space<vmem>>, vector<1x1x5xf32>,
    } else {
    }
    return
  }
  func.func @transform_0(%arg0: i32, %arg1: i32) -> (i32, i32, i32) {
    %c0_i32 = arith.constant 0 : i32
    %c0_i32_0 = arith.constant 0 : i32
    %c0_i32_1 = arith.constant 0 : i32
    return %arg0, %c0_i32, %c0_i32_0 : i32, i32, i32
  }
  func.func @transform_1(%arg0: i32, %arg1: i32) -> (i32, i32) {
    %c0_i32 = arith.constant 0 : i32
    %c0_i32_0 = arith.constant 0 : i32
    %c0_i32_1 = arith.constant 0 : i32
    return %c0_i32, %c0_i32_0 : i32, i32
  }
  func.func @transform_2(%arg0: i32, %arg1: i32) -> (i32, i32) {
    %c0_i32 = arith.constant 0 : i32
    %c0_i32_0 = arith.constant 0 : i32
    %c0_i32_1 = arith.constant 0 : i32
    return %c0_i32, %c0_i32_0 : i32, i32
  }
  func.func @transform_3(%arg0: i32, %arg1: i32) -> (i32, i32, i32) {
    %c0_i32 = arith.constant 0 : i32
    %c0_i32_0 = arith.constant 0 : i32
    %c0_i32_1 = arith.constant 0 : i32
    return %arg1, %c0_i32, %c0_i32_0 : i32, i32, i32
  }
  func.func @transform_4(%arg0: i32, %arg1: i32) -> (i32, i32, i32) {
    %c0_i32 = arith.constant 0 : i32
    %c0_i32_0 = arith.constant 0 : i32
    %c0_i32_1 = arith.constant 0 : i32
    return %arg1, %c0_i32, %c0_i32_0 : i32, i32, i32
  }
  func.func @transform_5(%arg0: i32, %arg1: i32) -> (i32, i32, i32, i32) {
    %c0_i32 = arith.constant 0 : i32
    %c0_i32_0 = arith.constant 0 : i32
    %c0_i32_1 = arith.constant 0 : i32
    %c0_i32_2 = arith.constant 0 : i32
    return %arg1, %c0_i32, %c0_i32_0, %c0_i32_1 : i32, i32, i32, i32
  }
  func.func @transform_6(%arg0: i32, %arg1: i32) -> (i32, i32, i32, i32) {
    %c0_i32 = arith.constant 0 : i32
    %c0_i32_0 = arith.constant 0 : i32
    %c0_i32_1 = arith.constant 0 : i32
    %c0_i32_2 = arith.constant 0 : i32
    return %arg1, %c0_i32, %c0_i32_0, %c0_i32_1 : i32, i32, i32, i32
  }
  func.func @transform_7(%arg0: i32, %arg1: i32) -> (i32, i32, i32, i32) {
    %c0_i32 = arith.constant 0 : i32
    %c0_i32_0 = arith.constant 0 : i32
    %c0_i32_1 = arith.constant 0 : i32
    %c0_i32_2 = arith.constant 0 : i32
    return %arg1, %c0_i32, %c0_i32_0, %c0_i32_1 : i32, i32, i32, i32
  }
  func.func @transform_8(%arg0: i32, %arg1: i32) -> (i32, i32, i32) {
    %c0_i32 = arith.constant 0 : i32
    %c0_i32_0 = arith.constant 0 : i32
    %c0_i32_1 = arith.constant 0 : i32
    return %arg1, %c0_i32, %c0_i32_0 : i32, i32, i32
  }
  func.func @transform_9(%arg0: i32, %arg1: i32) -> (i32, i32, i32) {
    %c0_i32 = arith.constant 0 : i32
    %c0_i32_0 = arith.constant 0 : i32
    %c0_i32_1 = arith.constant 0 : i32
    return %arg1, %c0_i32, %c0_i32_0 : i32, i32, i32
  }
  func.func @transform_10(%arg0: i32, %arg1: i32) -> (i32, i32, i32) {
    %c0_i32 = arith.constant 0 : i32
    %c0_i32_0 = arith.constant 0 : i32
    %c0_i32_1 = arith.constant 0 : i32
    return %arg1, %c0_i32, %c0_i32_0 : i32, i32, i32
  }
  func.func @transform_11(%arg0: i32, %arg1: i32) -> (i32, i32, i32) {
    %c0_i32 = arith.constant 0 : i32
    %c0_i32_0 = arith.constant 0 : i32
    %c0_i32_1 = arith.constant 0 : i32
    return %arg1, %c0_i32, %c0_i32_0 : i32, i32, i32
  }
  func.func @transform_12(%arg0: i32, %arg1: i32) -> (i32, i32, i32) {
    %c0_i32 = arith.constant 0 : i32
    %c0_i32_0 = arith.constant 0 : i32
    %c0_i32_1 = arith.constant 0 : i32
    return %arg1, %c0_i32, %c0_i32_0 : i32, i32, i32
  }
  func.func @transform_13(%arg0: i32, %arg1: i32) -> (i32, i32, i32) {
    %c0_i32 = arith.constant 0 : i32
    %c0_i32_0 = arith.constant 0 : i32
    %c0_i32_1 = arith.constant 0 : i32
    return %arg1, %c0_i32, %c0_i32_0 : i32, i32, i32
  }
  func.func @transform_14(%arg0: i32, %arg1: i32) -> (i32, i32, i32) {
    %c0_i32 = arith.constant 0 : i32
    %c0_i32_0 = arith.constant 0 : i32
    %c0_i32_1 = arith.constant 0 : i32
    return %arg1, %c0_i32, %c0_i32_0 : i32, i32, i32
  }
  func.func @transform_15(%arg0: i32, %arg1: i32) -> (i32, i32) {
    %c0_i32 = arith.constant 0 : i32
    %c0_i32_0 = arith.constant 0 : i32
    %c0_i32_1 = arith.constant 0 : i32
    return %c0_i32, %c0_i32_0 : i32, i32
  }
  func.func @transform_16(%arg0: i32, %arg1: i32) -> (i32, i32) {
    %c0_i32 = arith.constant 0 : i32
    %c0_i32_0 = arith.constant 0 : i32
    %c0_i32_1 = arith.constant 0 : i32
    return %c0_i32, %c0_i32_0 : i32, i32
  }
  func.func @transform_17(%arg0: i32, %arg1: i32) -> (i32, i32) {
    %c0_i32 = arith.constant 0 : i32
    %c0_i32_0 = arith.constant 0 : i32
    %c0_i32_1 = arith.constant 0 : i32
    return %c0_i32, %c0_i32_0 : i32, i32
  }
  func.func @transform_18(%arg0: i32, %arg1: i32) -> (i32, i32) {
    %c0_i32 = arith.constant 0 : i32
    %c0_i32_0 = arith.constant 0 : i32
    %c0_i32_1 = arith.constant 0 : i32
    return %c0_i32, %c0_i32_0 : i32, i32
  }
  func.func @transform_19(%arg0: i32, %arg1: i32) -> (i32, i32, i32) {
    %c0_i32 = arith.constant 0 : i32
    %c0_i32_0 = arith.constant 0 : i32
    %c0_i32_1 = arith.constant 0 : i32
    return %arg0, %c0_i32, %c0_i32_0 : i32, i32, i32
  }
  func.func @transform_20(%arg0: i32, %arg1: i32) -> (i32, i32, i32) {
    %c0_i32 = arith.constant 0 : i32
    %c0_i32_0 = arith.constant 0 : i32
    %c0_i32_1 = arith.constant 0 : i32
    return %arg0, %c0_i32, %c0_i32_0 : i32, i32, i32
  }
}

</mosaic_0001>

<llo_original>
// kernel: _lambda_.1
$region0: #{_lambda_.1}
  #allocation0 [shape = 'u32[]', space=smem, size = 0x4, offset = 0x4, fixed_abs, tag = 'smem constant byte address 0x4 - core index']
  #allocation1 [shape = 'u32[144,128]{1,0:T(1,128)}', space=vmem, size = 0x12000, scoped, tag = 'internal scratch']
  #allocation2 [shape = 'f32[6,32]{1,0:T(8,128)}', space=vmem, size = 0x1000, scoped, tag = 'scratch operand']
  %s0 = inlined_call_operand.vmem [shape: f32[2,6,768], index: 0, kind: input, shape index: {}]
  %s1 = inlined_call_operand.vmem [shape: f32[6,32], index: 1, kind: input, shape index: {}]
  %s2 = inlined_call_operand.vmem [shape: bf16[768,32], index: 2, kind: input, shape index: {}]
  %s3 = inlined_call_operand.vmem [shape: f32[2,1,32], index: 3, kind: input, shape index: {}]
  %s4 = inlined_call_operand.vmem [shape: f32[2,1,32], index: 4, kind: input, shape index: {}]
  %s5 = inlined_call_operand.vmem [shape: bf16[2,2,32,48], index: 5, kind: input, shape index: {}]
  %s6 = inlined_call_operand.vmem [shape: f32[2,2,1,48], index: 6, kind: input, shape index: {}]
  %s7 = inlined_call_operand.vmem [shape: bf16[2,2,16,32], index: 7, kind: input, shape index: {}]
  %s8 = inlined_call_operand.vmem [shape: f32[2,1,32], index: 8, kind: input, shape index: {}]
  %s9 = inlined_call_operand.vmem [shape: f32[2,1,32], index: 9, kind: input, shape index: {}]
  %s10 = inlined_call_operand.vmem [shape: f32[2,1,32], index: 10, kind: input, shape index: {}]
  %s11 = inlined_call_operand.vmem [shape: bf16[2,32,64], index: 11, kind: input, shape index: {}]
  %s12 = inlined_call_operand.vmem [shape: f32[2,1,64], index: 12, kind: input, shape index: {}]
  %s13 = inlined_call_operand.vmem [shape: bf16[2,64,32], index: 13, kind: input, shape index: {}]
  %s14 = inlined_call_operand.vmem [shape: f32[2,1,32], index: 14, kind: input, shape index: {}]
  %s15 = inlined_call_operand.vmem [shape: f32[1,32], index: 15, kind: input, shape index: {}]
  %s16 = inlined_call_operand.vmem [shape: f32[1,32], index: 16, kind: input, shape index: {}]
  %s17 = inlined_call_operand.vmem [shape: bf16[32,5], index: 17, kind: input, shape index: {}]
  %s18 = inlined_call_operand.vmem [shape: f32[1,5], index: 18, kind: input, shape index: {}]
  %s19 = inlined_call_operand.hbm [shape: f32[2,1,5], index: 19, kind: output, shape index: {0}]
  %s20 = inlined_call_operand.vmem [shape: f32[2,6,32], index: 20, kind: output, shape index: {1}]
  %21 = xla_tuple %s19, %s20
  %s22 = sld [smem:[#allocation0]]
  $region125: #{_lambda_.1} parent=0
    _
  %s24 = ssub.s32 1, %s22
  %s25 = scalar_select 0, %s24, %s22
  $region1: #{_lambda_.1} parent=0
    #allocation3 [shape = 'u8[1024]{0}', space=vmem, size = 0x400, scoped, tag = 'output window, operand 0']
    #allocation4 [shape = 's32[2]{0}', space=sflag, size = 0x8, scoped, tag = 'scoped memory for _lambda_.1']
    %26 = vsyncpa [#allocation4], 0
    %s27 = scalar_lea.sflag [#allocation4], 1
    %28 = vsyncpa %s27, 0
    loop: start=0, step=1, limit=6
    $region2: #{_lambda_.1} parent=1 // loop_pre_header
      _
    $region3: #{_lambda_.1} parent=1 // loop_header
      %s30 = sphi 0, %s34
      %p31 = scmp.ge.s32.totalorder %s30, 6
      %s37 = sphi 0, %s49
      %s38 = sphi 0, %s45
      %s39 = sphi 0, %s37
      %s40 = sphi 0, %s38
      %s41 = sphi 0, %s39
      %s42 = sphi 0, %s40
      %s52 = sphi 0, %s54
      %s55 = sphi 0, %s52
      %s56 = sphi 0, %s55
      %s72 = sphi 0, %s56
      %s76 = sphi 0, %s76
      %s78 = sphi 0, %s76
      %s79 = sphi 0, %s78
      %s93 = sphi 0, %s79
      %s97 = sphi 0, %s97
      %s99 = sphi 0, %s97
      %s100 = sphi 0, %s99
      %s114 = sphi 0, %s100
      %s120 = sphi 0, %s122
      %s123 = sphi 0, %s120
      %s124 = sphi 0, %s123
      %s140 = sphi 0, %s124
      %s146 = sphi 0, %s148
      %s149 = sphi 0, %s146
      %s150 = sphi 0, %s149
      %s166 = sphi 0, %s150
      %s172 = sphi 0, %s174
      %s175 = sphi 0, %s172
      %s176 = sphi 0, %s175
      %s192 = sphi 0, %s176
      %s198 = sphi 0, %s200
      %s201 = sphi 0, %s198
      %s202 = sphi 0, %s201
      %s218 = sphi 0, %s202
      %s224 = sphi 0, %s226
      %s227 = sphi 0, %s224
      %s228 = sphi 0, %s227
      %s244 = sphi 0, %s228
      %s250 = sphi 0, %s252
      %s253 = sphi 0, %s250
      %s254 = sphi 0, %s253
      %s270 = sphi 0, %s254
      %s276 = sphi 0, %s278
      %s279 = sphi 0, %s276
      %s280 = sphi 0, %s279
      %s296 = sphi 0, %s280
      %s302 = sphi 0, %s304
      %s305 = sphi 0, %s302
      %s306 = sphi 0, %s305
      %s322 = sphi 0, %s306
      %s328 = sphi 0, %s330
      %s331 = sphi 0, %s328
      %s332 = sphi 0, %s331
      %s348 = sphi 0, %s332
      %s354 = sphi 0, %s356
      %s357 = sphi 0, %s354
      %s358 = sphi 0, %s357
      %s374 = sphi 0, %s358
      %s380 = sphi 0, %s382
      %s383 = sphi 0, %s380
      %s384 = sphi 0, %s383
      %s400 = sphi 0, %s384
      %s406 = sphi 0, %s408
      %s409 = sphi 0, %s406
      %s410 = sphi 0, %s409
      %s426 = sphi 0, %s410
      %s430 = sphi 0, %s430
      %s432 = sphi 0, %s430
      %s433 = sphi 0, %s432
      %s447 = sphi 0, %s433
      %s451 = sphi 0, %s451
      %s453 = sphi 0, %s451
      %s454 = sphi 0, %s453
      %s468 = sphi 0, %s454
      %s472 = sphi 0, %s472
      %s474 = sphi 0, %s472
      %s475 = sphi 0, %s474
      %s489 = sphi 0, %s475
      %s493 = sphi 0, %s493
      %s495 = sphi 0, %s493
      %s496 = sphi 0, %s495
      %s510 = sphi 0, %s496
      %s516 = sphi 0, %s518
      %s519 = sphi 0, %s516
      %s520 = sphi 0, %s519
      %s536 = sphi 0, %s520
      %s542 = sphi 0, %s544
      %s545 = sphi 0, %s542
      %s546 = sphi 0, %s545
      %s562 = sphi 0, %s546
    $region4: #{_lambda_.1} parent=1 // loop_header_branch
      %33 = sbr.rel (%p31) target = $region8
    $region5: #{_lambda_.1} parent=1 // loop_body
      %s35 = ssub.s32 %s30, 1
      %s36 = ssub.s32 %s30, 2
      %s43 = sadd.s32 1, %s38
      %p44 = scmp.ge.s32.totalorder %s43, 2
      %s45 = scalar_select %p44, 0, %s43
      %s46 = sadd.s32 1, %s37
      %s47 = scalar_select %p44, %s46, %s37
      %p48 = scmp.ge.s32.totalorder %s47, 2
      %s49 = scalar_select %p48, 0, %s47
      %s50 = ssub.s32 %s37, %s49
      %p51 = scmp.eq.s32.totalorder %s50, 0
      %s53 = sadd.s32 %s52, 1
      %s54 = scalar_select %p51, %s52, %s53
      %p57 = pneg %p51
      %p58 = scmp.eq.s32.totalorder %s30, 3
      %p59 = por %p57, %p58
      %p60 = scmp.ne.s32.totalorder %s52, %s55
      %p61 = scmp.eq.s32.totalorder %s30, 0
      %p62 = por %p60, %p61
      %p63 = scmp.ne.s32.totalorder %s52, %s55
      %p64 = scmp.eq.s32.totalorder %s35, 3
      %p65 = por %p63, %p64
      %p66 = scmp.ne.s32.totalorder %s55, %s56
      %p67 = scmp.eq.s32.totalorder %s35, 0
      %p68 = por %p66, %p67
      %p69 = scmp.ne.s32.totalorder %s55, %s56
      %p70 = scmp.eq.s32.totalorder %s36, 3
      %p71 = por %p69, %p70
      %p73 = scmp.ne.s32.totalorder %s56, %s72
      %p74 = scmp.eq.s32.totalorder %s36, 0
      %p75 = por %p73, %p74
      %s77 = sadd.s32 %s76, 1
      %p80 = scmp.eq.s32.totalorder %s30, 3
      %p81 = scmp.ne.s32.totalorder %s76, %s78
      %p82 = scmp.eq.s32.totalorder %s30, 0
      %p83 = por %p81, %p82
      %p84 = scmp.ne.s32.totalorder %s76, %s78
      %p85 = scmp.eq.s32.totalorder %s35, 3
      %p86 = por %p84, %p85
      %p87 = scmp.ne.s32.totalorder %s78, %s79
      %p88 = scmp.eq.s32.totalorder %s35, 0
      %p89 = por %p87, %p88
      %p90 = scmp.ne.s32.totalorder %s78, %s79
      %p91 = scmp.eq.s32.totalorder %s36, 3
      %p92 = por %p90, %p91
      %p94 = scmp.ne.s32.totalorder %s79, %s93
      %p95 = scmp.eq.s32.totalorder %s36, 0
      %p96 = por %p94, %p95
      %s98 = sadd.s32 %s97, 1
      %p101 = scmp.eq.s32.totalorder %s30, 3
      %p102 = scmp.ne.s32.totalorder %s97, %s99
      %p103 = scmp.eq.s32.totalorder %s30, 0
      %p104 = por %p102, %p103
      %p105 = scmp.ne.s32.totalorder %s97, %s99
      %p106 = scmp.eq.s32.totalorder %s35, 3
      %p107 = por %p105, %p106
      %p108 = scmp.ne.s32.totalorder %s99, %s100
      %p109 = scmp.eq.s32.totalorder %s35, 0
      %p110 = por %p108, %p109
      %p111 = scmp.ne.s32.totalorder %s99, %s100
      %p112 = scmp.eq.s32.totalorder %s36, 3
      %p113 = por %p111, %p112
      %p115 = scmp.ne.s32.totalorder %s100, %s114
      %p116 = scmp.eq.s32.totalorder %s36, 0
      %p117 = por %p115, %p116
      %s118 = ssub.s32 %s38, %s45
      %p119 = scmp.eq.s32.totalorder %s118, 0
      %s121 = sadd.s32 %s120, 1
      %s122 = scalar_select %p119, %s120, %s121
      %p125 = pneg %p119
      %p126 = scmp.eq.s32.totalorder %s30, 3
      %p127 = por %p125, %p126
      %p128 = scmp.ne.s32.totalorder %s120, %s123
      %p129 = scmp.eq.s32.totalorder %s30, 0
      %p130 = por %p128, %p129
      %p131 = scmp.ne.s32.totalorder %s120, %s123
      %p132 = scmp.eq.s32.totalorder %s35, 3
      %p133 = por %p131, %p132
      %p134 = scmp.ne.s32.totalorder %s123, %s124
      %p135 = scmp.eq.s32.totalorder %s35, 0
      %p136 = por %p134, %p135
      %p137 = scmp.ne.s32.totalorder %s123, %s124
      %p138 = scmp.eq.s32.totalorder %s36, 3
      %p139 = por %p137, %p138
      %p141 = scmp.ne.s32.totalorder %s124, %s140
      %p142 = scmp.eq.s32.totalorder %s36, 0
      %p143 = por %p141, %p142
      %s144 = ssub.s32 %s38, %s45
      %p145 = scmp.eq.s32.totalorder %s144, 0
      %s147 = sadd.s32 %s146, 1
      %s148 = scalar_select %p145, %s146, %s147
      %p151 = pneg %p145
      %p152 = scmp.eq.s32.totalorder %s30, 3
      %p153 = por %p151, %p152
      %p154 = scmp.ne.s32.totalorder %s146, %s149
      %p155 = scmp.eq.s32.totalorder %s30, 0
      %p156 = por %p154, %p155
      %p157 = scmp.ne.s32.totalorder %s146, %s149
      %p158 = scmp.eq.s32.totalorder %s35, 3
      %p159 = por %p157, %p158
      %p160 = scmp.ne.s32.totalorder %s149, %s150
      %p161 = scmp.eq.s32.totalorder %s35, 0
      %p162 = por %p160, %p161
      %p163 = scmp.ne.s32.totalorder %s149, %s150
      %p164 = scmp.eq.s32.totalorder %s36, 3
      %p165 = por %p163, %p164
      %p167 = scmp.ne.s32.totalorder %s150, %s166
      %p168 = scmp.eq.s32.totalorder %s36, 0
      %p169 = por %p167, %p168
      %s170 = ssub.s32 %s38, %s45
      %p171 = scmp.eq.s32.totalorder %s170, 0
      %s173 = sadd.s32 %s172, 1
      %s174 = scalar_select %p171, %s172, %s173
      %p177 = pneg %p171
      %p178 = scmp.eq.s32.totalorder %s30, 3
      %p179 = por %p177, %p178
      %p180 = scmp.ne.s32.totalorder %s172, %s175
      %p181 = scmp.eq.s32.totalorder %s30, 0
      %p182 = por %p180, %p181
      %p183 = scmp.ne.s32.totalorder %s172, %s175
      %p184 = scmp.eq.s32.totalorder %s35, 3
      %p185 = por %p183, %p184
      %p186 = scmp.ne.s32.totalorder %s175, %s176
      %p187 = scmp.eq.s32.totalorder %s35, 0
      %p188 = por %p186, %p187
      %p189 = scmp.ne.s32.totalorder %s175, %s176
      %p190 = scmp.eq.s32.totalorder %s36, 3
      %p191 = por %p189, %p190
      %p193 = scmp.ne.s32.totalorder %s176, %s192
      %p194 = scmp.eq.s32.totalorder %s36, 0
      %p195 = por %p193, %p194
      %s196 = ssub.s32 %s38, %s45
      %p197 = scmp.eq.s32.totalorder %s196, 0
      %s199 = sadd.s32 %s198, 1
      %s200 = scalar_select %p197, %s198, %s199
      %p203 = pneg %p197
      %p204 = scmp.eq.s32.totalorder %s30, 3
      %p205 = por %p203, %p204
      %p206 = scmp.ne.s32.totalorder %s198, %s201
      %p207 = scmp.eq.s32.totalorder %s30, 0
      %p208 = por %p206, %p207
      %p209 = scmp.ne.s32.totalorder %s198, %s201
      %p210 = scmp.eq.s32.totalorder %s35, 3
      %p211 = por %p209, %p210
      %p212 = scmp.ne.s32.totalorder %s201, %s202
      %p213 = scmp.eq.s32.totalorder %s35, 0
      %p214 = por %p212, %p213
      %p215 = scmp.ne.s32.totalorder %s201, %s202
      %p216 = scmp.eq.s32.totalorder %s36, 3
      %p217 = por %p215, %p216
      %p219 = scmp.ne.s32.totalorder %s202, %s218
      %p220 = scmp.eq.s32.totalorder %s36, 0
      %p221 = por %p219, %p220
      %s222 = ssub.s32 %s38, %s45
      %p223 = scmp.eq.s32.totalorder %s222, 0
      %s225 = sadd.s32 %s224, 1
      %s226 = scalar_select %p223, %s224, %s225
      %p229 = pneg %p223
      %p230 = scmp.eq.s32.totalorder %s30, 3
      %p231 = por %p229, %p230
      %p232 = scmp.ne.s32.totalorder %s224, %s227
      %p233 = scmp.eq.s32.totalorder %s30, 0
      %p234 = por %p232, %p233
      %p235 = scmp.ne.s32.totalorder %s224, %s227
      %p236 = scmp.eq.s32.totalorder %s35, 3
      %p237 = por %p235, %p236
      %p238 = scmp.ne.s32.totalorder %s227, %s228
      %p239 = scmp.eq.s32.totalorder %s35, 0
      %p240 = por %p238, %p239
      %p241 = scmp.ne.s32.totalorder %s227, %s228
      %p242 = scmp.eq.s32.totalorder %s36, 3
      %p243 = por %p241, %p242
      %p245 = scmp.ne.s32.totalorder %s228, %s244
      %p246 = scmp.eq.s32.totalorder %s36, 0
      %p247 = por %p245, %p246
      %s248 = ssub.s32 %s38, %s45
      %p249 = scmp.eq.s32.totalorder %s248, 0
      %s251 = sadd.s32 %s250, 1
      %s252 = scalar_select %p249, %s250, %s251
      %p255 = pneg %p249
      %p256 = scmp.eq.s32.totalorder %s30, 3
      %p257 = por %p255, %p256
      %p258 = scmp.ne.s32.totalorder %s250, %s253
      %p259 = scmp.eq.s32.totalorder %s30, 0
      %p260 = por %p258, %p259
      %p261 = scmp.ne.s32.totalorder %s250, %s253
      %p262 = scmp.eq.s32.totalorder %s35, 3
      %p263 = por %p261, %p262
      %p264 = scmp.ne.s32.totalorder %s253, %s254
      %p265 = scmp.eq.s32.totalorder %s35, 0
      %p266 = por %p264, %p265
      %p267 = scmp.ne.s32.totalorder %s253, %s254
      %p268 = scmp.eq.s32.totalorder %s36, 3
      %p269 = por %p267, %p268
      %p271 = scmp.ne.s32.totalorder %s254, %s270
      %p272 = scmp.eq.s32.totalorder %s36, 0
      %p273 = por %p271, %p272
      %s274 = ssub.s32 %s38, %s45
      %p275 = scmp.eq.s32.totalorder %s274, 0
      %s277 = sadd.s32 %s276, 1
      %s278 = scalar_select %p275, %s276, %s277
      %p281 = pneg %p275
      %p282 = scmp.eq.s32.totalorder %s30, 3
      %p283 = por %p281, %p282
      %p284 = scmp.ne.s32.totalorder %s276, %s279
      %p285 = scmp.eq.s32.totalorder %s30, 0
      %p286 = por %p284, %p285
      %p287 = scmp.ne.s32.totalorder %s276, %s279
      %p288 = scmp.eq.s32.totalorder %s35, 3
      %p289 = por %p287, %p288
      %p290 = scmp.ne.s32.totalorder %s279, %s280
      %p291 = scmp.eq.s32.totalorder %s35, 0
      %p292 = por %p290, %p291
      %p293 = scmp.ne.s32.totalorder %s279, %s280
      %p294 = scmp.eq.s32.totalorder %s36, 3
      %p295 = por %p293, %p294
      %p297 = scmp.ne.s32.totalorder %s280, %s296
      %p298 = scmp.eq.s32.totalorder %s36, 0
      %p299 = por %p297, %p298
      %s300 = ssub.s32 %s38, %s45
      %p301 = scmp.eq.s32.totalorder %s300, 0
      %s303 = sadd.s32 %s302, 1
      %s304 = scalar_select %p301, %s302, %s303
      %p307 = pneg %p301
      %p308 = scmp.eq.s32.totalorder %s30, 3
      %p309 = por %p307, %p308
      %p310 = scmp.ne.s32.totalorder %s302, %s305
      %p311 = scmp.eq.s32.totalorder %s30, 0
      %p312 = por %p310, %p311
      %p313 = scmp.ne.s32.totalorder %s302, %s305
      %p314 = scmp.eq.s32.totalorder %s35, 3
      %p315 = por %p313, %p314
      %p316 = scmp.ne.s32.totalorder %s305, %s306
      %p317 = scmp.eq.s32.totalorder %s35, 0
      %p318 = por %p316, %p317
      %p319 = scmp.ne.s32.totalorder %s305, %s306
      %p320 = scmp.eq.s32.totalorder %s36, 3
      %p321 = por %p319, %p320
      %p323 = scmp.ne.s32.totalorder %s306, %s322
      %p324 = scmp.eq.s32.totalorder %s36, 0
      %p325 = por %p323, %p324
      %s326 = ssub.s32 %s38, %s45
      %p327 = scmp.eq.s32.totalorder %s326, 0
      %s329 = sadd.s32 %s328, 1
      %s330 = scalar_select %p327, %s328, %s329
      %p333 = pneg %p327
      %p334 = scmp.eq.s32.totalorder %s30, 3
      %p335 = por %p333, %p334
      %p336 = scmp.ne.s32.totalorder %s328, %s331
      %p337 = scmp.eq.s32.totalorder %s30, 0
      %p338 = por %p336, %p337
      %p339 = scmp.ne.s32.totalorder %s328, %s331
      %p340 = scmp.eq.s32.totalorder %s35, 3
      %p341 = por %p339, %p340
      %p342 = scmp.ne.s32.totalorder %s331, %s332
      %p343 = scmp.eq.s32.totalorder %s35, 0
      %p344 = por %p342, %p343
      %p345 = scmp.ne.s32.totalorder %s331, %s332
      %p346 = scmp.eq.s32.totalorder %s36, 3
      %p347 = por %p345, %p346
      %p349 = scmp.ne.s32.totalorder %s332, %s348
      %p350 = scmp.eq.s32.totalorder %s36, 0
      %p351 = por %p349, %p350
      %s352 = ssub.s32 %s38, %s45
      %p353 = scmp.eq.s32.totalorder %s352, 0
      %s355 = sadd.s32 %s354, 1
      %s356 = scalar_select %p353, %s354, %s355
      %p359 = pneg %p353
      %p360 = scmp.eq.s32.totalorder %s30, 3
      %p361 = por %p359, %p360
      %p362 = scmp.ne.s32.totalorder %s354, %s357
      %p363 = scmp.eq.s32.totalorder %s30, 0
      %p364 = por %p362, %p363
      %p365 = scmp.ne.s32.totalorder %s354, %s357
      %p366 = scmp.eq.s32.totalorder %s35, 3
      %p367 = por %p365, %p366
      %p368 = scmp.ne.s32.totalorder %s357, %s358
      %p369 = scmp.eq.s32.totalorder %s35, 0
      %p370 = por %p368, %p369
      %p371 = scmp.ne.s32.totalorder %s357, %s358
      %p372 = scmp.eq.s32.totalorder %s36, 3
      %p373 = por %p371, %p372
      %p375 = scmp.ne.s32.totalorder %s358, %s374
      %p376 = scmp.eq.s32.totalorder %s36, 0
      %p377 = por %p375, %p376
      %s378 = ssub.s32 %s38, %s45
      %p379 = scmp.eq.s32.totalorder %s378, 0
      %s381 = sadd.s32 %s380, 1
      %s382 = scalar_select %p379, %s380, %s381
      %p385 = pneg %p379
      %p386 = scmp.eq.s32.totalorder %s30, 3
      %p387 = por %p385, %p386
      %p388 = scmp.ne.s32.totalorder %s380, %s383
      %p389 = scmp.eq.s32.totalorder %s30, 0
      %p390 = por %p388, %p389
      %p391 = scmp.ne.s32.totalorder %s380, %s383
      %p392 = scmp.eq.s32.totalorder %s35, 3
      %p393 = por %p391, %p392
      %p394 = scmp.ne.s32.totalorder %s383, %s384
      %p395 = scmp.eq.s32.totalorder %s35, 0
      %p396 = por %p394, %p395
      %p397 = scmp.ne.s32.totalorder %s383, %s384
      %p398 = scmp.eq.s32.totalorder %s36, 3
      %p399 = por %p397, %p398
      %p401 = scmp.ne.s32.totalorder %s384, %s400
      %p402 = scmp.eq.s32.totalorder %s36, 0
      %p403 = por %p401, %p402
      %s404 = ssub.s32 %s38, %s45
      %p405 = scmp.eq.s32.totalorder %s404, 0
      %s407 = sadd.s32 %s406, 1
      %s408 = scalar_select %p405, %s406, %s407
      %p411 = pneg %p405
      %p412 = scmp.eq.s32.totalorder %s30, 3
      %p413 = por %p411, %p412
      %p414 = scmp.ne.s32.totalorder %s406, %s409
      %p415 = scmp.eq.s32.totalorder %s30, 0
      %p416 = por %p414, %p415
      %p417 = scmp.ne.s32.totalorder %s406, %s409
      %p418 = scmp.eq.s32.totalorder %s35, 3
      %p419 = por %p417, %p418
      %p420 = scmp.ne.s32.totalorder %s409, %s410
      %p421 = scmp.eq.s32.totalorder %s35, 0
      %p422 = por %p420, %p421
      %p423 = scmp.ne.s32.totalorder %s409, %s410
      %p424 = scmp.eq.s32.totalorder %s36, 3
      %p425 = por %p423, %p424
      %p427 = scmp.ne.s32.totalorder %s410, %s426
      %p428 = scmp.eq.s32.totalorder %s36, 0
      %p429 = por %p427, %p428
      %s431 = sadd.s32 %s430, 1
      %p434 = scmp.eq.s32.totalorder %s30, 3
      %p435 = scmp.ne.s32.totalorder %s430, %s432
      %p436 = scmp.eq.s32.totalorder %s30, 0
      %p437 = por %p435, %p436
      %p438 = scmp.ne.s32.totalorder %s430, %s432
      %p439 = scmp.eq.s32.totalorder %s35, 3
      %p440 = por %p438, %p439
      %p441 = scmp.ne.s32.totalorder %s432, %s433
      %p442 = scmp.eq.s32.totalorder %s35, 0
      %p443 = por %p441, %p442
      %p444 = scmp.ne.s32.totalorder %s432, %s433
      %p445 = scmp.eq.s32.totalorder %s36, 3
      %p446 = por %p444, %p445
      %p448 = scmp.ne.s32.totalorder %s433, %s447
      %p449 = scmp.eq.s32.totalorder %s36, 0
      %p450 = por %p448, %p449
      %s452 = sadd.s32 %s451, 1
      %p455 = scmp.eq.s32.totalorder %s30, 3
      %p456 = scmp.ne.s32.totalorder %s451, %s453
      %p457 = scmp.eq.s32.totalorder %s30, 0
      %p458 = por %p456, %p457
      %p459 = scmp.ne.s32.totalorder %s451, %s453
      %p460 = scmp.eq.s32.totalorder %s35, 3
      %p461 = por %p459, %p460
      %p462 = scmp.ne.s32.totalorder %s453, %s454
      %p463 = scmp.eq.s32.totalorder %s35, 0
      %p464 = por %p462, %p463
      %p465 = scmp.ne.s32.totalorder %s453, %s454
      %p466 = scmp.eq.s32.totalorder %s36, 3
      %p467 = por %p465, %p466
      %p469 = scmp.ne.s32.totalorder %s454, %s468
      %p470 = scmp.eq.s32.totalorder %s36, 0
      %p471 = por %p469, %p470
      %s473 = sadd.s32 %s472, 1
      %p476 = scmp.eq.s32.totalorder %s30, 3
      %p477 = scmp.ne.s32.totalorder %s472, %s474
      %p478 = scmp.eq.s32.totalorder %s30, 0
      %p479 = por %p477, %p478
      %p480 = scmp.ne.s32.totalorder %s472, %s474
      %p481 = scmp.eq.s32.totalorder %s35, 3
      %p482 = por %p480, %p481
      %p483 = scmp.ne.s32.totalorder %s474, %s475
      %p484 = scmp.eq.s32.totalorder %s35, 0
      %p485 = por %p483, %p484
      %p486 = scmp.ne.s32.totalorder %s474, %s475
      %p487 = scmp.eq.s32.totalorder %s36, 3
      %p488 = por %p486, %p487
      %p490 = scmp.ne.s32.totalorder %s475, %s489
      %p491 = scmp.eq.s32.totalorder %s36, 0
      %p492 = por %p490, %p491
      %s494 = sadd.s32 %s493, 1
      %p497 = scmp.eq.s32.totalorder %s30, 3
      %p498 = scmp.ne.s32.totalorder %s493, %s495
      %p499 = scmp.eq.s32.totalorder %s30, 0
      %p500 = por %p498, %p499
      %p501 = scmp.ne.s32.totalorder %s493, %s495
      %p502 = scmp.eq.s32.totalorder %s35, 3
      %p503 = por %p501, %p502
      %p504 = scmp.ne.s32.totalorder %s495, %s496
      %p505 = scmp.eq.s32.totalorder %s35, 0
      %p506 = por %p504, %p505
      %p507 = scmp.ne.s32.totalorder %s495, %s496
      %p508 = scmp.eq.s32.totalorder %s36, 3
      %p509 = por %p507, %p508
      %p511 = scmp.ne.s32.totalorder %s496, %s510
      %p512 = scmp.eq.s32.totalorder %s36, 0
      %p513 = por %p511, %p512
      %s514 = ssub.s32 %s37, %s49
      %p515 = scmp.eq.s32.totalorder %s514, 0
      %s517 = sadd.s32 %s516, 1
      %s518 = scalar_select %p515, %s516, %s517
      %p521 = pneg %p515
      %p522 = scmp.eq.s32.totalorder %s30, 3
      %p523 = por %p521, %p522
      %p524 = scmp.ne.s32.totalorder %s516, %s519
      %p525 = scmp.eq.s32.totalorder %s30, 0
      %p526 = por %p524, %p525
      %p527 = scmp.ne.s32.totalorder %s516, %s519
      %p528 = scmp.eq.s32.totalorder %s35, 3
      %p529 = por %p527, %p528
      %p530 = scmp.ne.s32.totalorder %s519, %s520
      %p531 = scmp.eq.s32.totalorder %s35, 0
      %p532 = por %p530, %p531
      %p533 = scmp.ne.s32.totalorder %s519, %s520
      %p534 = scmp.eq.s32.totalorder %s36, 3
      %p535 = por %p533, %p534
      %p537 = scmp.ne.s32.totalorder %s520, %s536
      %p538 = scmp.eq.s32.totalorder %s36, 0
      %p539 = por %p537, %p538
      %s540 = ssub.s32 %s37, %s49
      %p541 = scmp.eq.s32.totalorder %s540, 0
      %s543 = sadd.s32 %s542, 1
      %s544 = scalar_select %p541, %s542, %s543
      %p547 = pneg %p541
      %p548 = scmp.eq.s32.totalorder %s30, 3
      %p549 = por %p547, %p548
      %p550 = scmp.ne.s32.totalorder %s542, %s545
      %p551 = scmp.eq.s32.totalorder %s30, 0
      %p552 = por %p550, %p551
      %p553 = scmp.ne.s32.totalorder %s542, %s545
      %p554 = scmp.eq.s32.totalorder %s35, 3
      %p555 = por %p553, %p554
      %p556 = scmp.ne.s32.totalorder %s545, %s546
      %p557 = scmp.eq.s32.totalorder %s35, 0
      %p558 = por %p556, %p557
      %p559 = scmp.ne.s32.totalorder %s545, %s546
      %p560 = scmp.eq.s32.totalorder %s36, 3
      %p561 = por %p559, %p560
      %p563 = scmp.ne.s32.totalorder %s546, %s562
      %p564 = scmp.eq.s32.totalorder %s36, 0
      %p565 = por %p563, %p564
      %p566 = scmp.le.s32.totalorder 1, %s30
      %p567 = scmp.lt.s32.totalorder %s30, 5
      %p568 = pnand %p566, %p567
      %p569 = pneg %p568
      // Predicated region
      $region9: #{_lambda_.1} parent=5 // pred_check
        _
      $region10: #{_lambda_.1} parent=5 // pred_check_branch
        %571 = sbr.rel (%p568) target = $region12
      $region11: #{_lambda_.1} parent=5 // pred_region
        %s572 = ssub.s32 %s30, 1
        // Predicated region
        $region13: #{_lambda_.1} parent=11 // pred_check
          %p573 = pneg %p89
        $region14: #{_lambda_.1} parent=11 // pred_check_branch
          %575 = sbr.rel (%p573) target = $region16
        $region15: #{_lambda_.1} parent=11 // pred_region
          _
        $region16: #{_lambda_.1} parent=11 // pred_fallthru
          _
        // Predicated region
        $region17: #{_lambda_.1} parent=11 // pred_check
          %p576 = pneg %p110
        $region18: #{_lambda_.1} parent=11 // pred_check_branch
          %578 = sbr.rel (%p576) target = $region20
        $region19: #{_lambda_.1} parent=11 // pred_region
          _
        $region20: #{_lambda_.1} parent=11 // pred_fallthru
          _
        // Predicated region
        $region21: #{_lambda_.1} parent=11 // pred_check
          %p579 = pneg %p443
        $region22: #{_lambda_.1} parent=11 // pred_check_branch
          %581 = sbr.rel (%p579) target = $region24
        $region23: #{_lambda_.1} parent=11 // pred_region
          _
        $region24: #{_lambda_.1} parent=11 // pred_fallthru
          _
        // Predicated region
        $region25: #{_lambda_.1} parent=11 // pred_check
          %p582 = pneg %p464
        $region26: #{_lambda_.1} parent=11 // pred_check_branch
          %584 = sbr.rel (%p582) target = $region28
        $region27: #{_lambda_.1} parent=11 // pred_region
          _
        $region28: #{_lambda_.1} parent=11 // pred_fallthru
          _
        // Predicated region
        $region29: #{_lambda_.1} parent=11 // pred_check
          %p585 = pneg %p485
        $region30: #{_lambda_.1} parent=11 // pred_check_branch
          %587 = sbr.rel (%p585) target = $region32
        $region31: #{_lambda_.1} parent=11 // pred_region
          _
        $region32: #{_lambda_.1} parent=11 // pred_fallthru
          _
        // Predicated region
        $region33: #{_lambda_.1} parent=11 // pred_check
          %p588 = pneg %p506
        $region34: #{_lambda_.1} parent=11 // pred_check_branch
          %590 = sbr.rel (%p588) target = $region36
        $region35: #{_lambda_.1} parent=11 // pred_region
          _
        $region36: #{_lambda_.1} parent=11 // pred_fallthru
          _
      $region12: #{_lambda_.1} parent=5 // pred_fallthru
        _
      %p591 = scmp.lt.s32.totalorder %s30, 4
      // Predicated region
      $region37: #{_lambda_.1} parent=5 // pred_check
        %p592 = pneg %p591
      $region38: #{_lambda_.1} parent=5 // pred_check_branch
        %594 = sbr.rel (%p592) target = $region40
      $region39: #{_lambda_.1} parent=5 // pred_region
        // Predicated region
        $region41: #{_lambda_.1} parent=39 // pred_check
          %p595 = pneg %p62
        $region42: #{_lambda_.1} parent=39 // pred_check_branch
          %597 = sbr.rel (%p595) target = $region44
        $region43: #{_lambda_.1} parent=39 // pred_region
          %p598 = scmp.lt.s32.totalorder %s37, 1
          %s599 = scalar_select %p598, %s37, 1
          %s600 = smul.addr %s599, 6
          %s601 = smul.addr %s600, 8
          %s602 = scalar_lea.vmem %s0, %s601
        $region44: #{_lambda_.1} parent=39 // pred_fallthru
          _
        // Predicated region
        $region45: #{_lambda_.1} parent=39 // pred_check
          %p603 = pneg %p130
        $region46: #{_lambda_.1} parent=39 // pred_check_branch
          %605 = sbr.rel (%p603) target = $region48
        $region47: #{_lambda_.1} parent=39 // pred_region
          %p606 = scmp.lt.s32.totalorder %s38, 1
          %s607 = scalar_select %p606, %s38, 1
          %s608 = scalar_lea.vmem %s3, %s607
        $region48: #{_lambda_.1} parent=39 // pred_fallthru
          _
        // Predicated region
        $region49: #{_lambda_.1} parent=39 // pred_check
          %p609 = pneg %p156
        $region50: #{_lambda_.1} parent=39 // pred_check_branch
          %611 = sbr.rel (%p609) target = $region52
        $region51: #{_lambda_.1} parent=39 // pred_region
          %p612 = scmp.lt.s32.totalorder %s38, 1
          %s613 = scalar_select %p612, %s38, 1
          %s614 = scalar_lea.vmem %s4, %s613
        $region52: #{_lambda_.1} parent=39 // pred_fallthru
          _
        // Predicated region
        $region53: #{_lambda_.1} parent=39 // pred_check
          %p615 = pneg %p182
        $region54: #{_lambda_.1} parent=39 // pred_check_branch
          %617 = sbr.rel (%p615) target = $region56
        $region55: #{_lambda_.1} parent=39 // pred_region
          %p618 = scmp.lt.s32.totalorder %s38, 1
          %s619 = scalar_select %p618, %s38, 1
          %s620 = smul.addr %s619, 8
          %s621 = smul.addr %s620, 4
          %s622 = scalar_lea.vmem %s5, %s621
        $region56: #{_lambda_.1} parent=39 // pred_fallthru
          _
        // Predicated region
        $region57: #{_lambda_.1} parent=39 // pred_check
          %p623 = pneg %p208
        $region58: #{_lambda_.1} parent=39 // pred_check_branch
          %625 = sbr.rel (%p623) target = $region60
        $region59: #{_lambda_.1} parent=39 // pred_region
          %p626 = scmp.lt.s32.totalorder %s38, 1
          %s627 = scalar_select %p626, %s38, 1
          %s628 = smul.addr %s627, 2
          %s629 = scalar_lea.vmem %s6, %s628
        $region60: #{_lambda_.1} parent=39 // pred_fallthru
          _
        // Predicated region
        $region61: #{_lambda_.1} parent=39 // pred_check
          %p630 = pneg %p234
        $region62: #{_lambda_.1} parent=39 // pred_check_branch
          %632 = sbr.rel (%p630) target = $region64
        $region63: #{_lambda_.1} parent=39 // pred_region
          %p633 = scmp.lt.s32.totalorder %s38, 1
          %s634 = scalar_select %p633, %s38, 1
          %s635 = smul.addr %s634, 4
          %s636 = smul.addr %s635, 4
          %s637 = scalar_lea.vmem %s7, %s636
        $region64: #{_lambda_.1} parent=39 // pred_fallthru
          _
        // Predicated region
        $region65: #{_lambda_.1} parent=39 // pred_check
          %p638 = pneg %p260
        $region66: #{_lambda_.1} parent=39 // pred_check_branch
          %640 = sbr.rel (%p638) target = $region68
        $region67: #{_lambda_.1} parent=39 // pred_region
          %p641 = scmp.lt.s32.totalorder %s38, 1
          %s642 = scalar_select %p641, %s38, 1
          %s643 = scalar_lea.vmem %s8, %s642
        $region68: #{_lambda_.1} parent=39 // pred_fallthru
          _
        // Predicated region
        $region69: #{_lambda_.1} parent=39 // pred_check
          %p644 = pneg %p286
        $region70: #{_lambda_.1} parent=39 // pred_check_branch
          %646 = sbr.rel (%p644) target = $region72
        $region71: #{_lambda_.1} parent=39 // pred_region
          %p647 = scmp.lt.s32.totalorder %s38, 1
          %s648 = scalar_select %p647, %s38, 1
          %s649 = scalar_lea.vmem %s9, %s648
        $region72: #{_lambda_.1} parent=39 // pred_fallthru
          _
        // Predicated region
        $region73: #{_lambda_.1} parent=39 // pred_check
          %p650 = pneg %p312
        $region74: #{_lambda_.1} parent=39 // pred_check_branch
          %652 = sbr.rel (%p650) target = $region76
        $region75: #{_lambda_.1} parent=39 // pred_region
          %p653 = scmp.lt.s32.totalorder %s38, 1
          %s654 = scalar_select %p653, %s38, 1
          %s655 = scalar_lea.vmem %s10, %s654
        $region76: #{_lambda_.1} parent=39 // pred_fallthru
          _
        // Predicated region
        $region77: #{_lambda_.1} parent=39 // pred_check
          %p656 = pneg %p338
        $region78: #{_lambda_.1} parent=39 // pred_check_branch
          %658 = sbr.rel (%p656) target = $region80
        $region79: #{_lambda_.1} parent=39 // pred_region
          %p659 = scmp.lt.s32.totalorder %s38, 1
          %s660 = scalar_select %p659, %s38, 1
          %s661 = smul.addr %s660, 4
          %s662 = smul.addr %s661, 4
          %s663 = scalar_lea.vmem %s11, %s662
        $region80: #{_lambda_.1} parent=39 // pred_fallthru
          _
        // Predicated region
        $region81: #{_lambda_.1} parent=39 // pred_check
          %p664 = pneg %p364
        $region82: #{_lambda_.1} parent=39 // pred_check_branch
          %666 = sbr.rel (%p664) target = $region84
        $region83: #{_lambda_.1} parent=39 // pred_region
          %p667 = scmp.lt.s32.totalorder %s38, 1
          %s668 = scalar_select %p667, %s38, 1
          %s669 = scalar_lea.vmem %s12, %s668
        $region84: #{_lambda_.1} parent=39 // pred_fallthru
          _
        // Predicated region
        $region85: #{_lambda_.1} parent=39 // pred_check
          %p670 = pneg %p390
        $region86: #{_lambda_.1} parent=39 // pred_check_branch
          %672 = sbr.rel (%p670) target = $region88
        $region87: #{_lambda_.1} parent=39 // pred_region
          %p673 = scmp.lt.s32.totalorder %s38, 1
          %s674 = scalar_select %p673, %s38, 1
          %s675 = smul.addr %s674, 8
          %s676 = smul.addr %s675, 4
          %s677 = scalar_lea.vmem %s13, %s676
        $region88: #{_lambda_.1} parent=39 // pred_fallthru
          _
        // Predicated region
        $region89: #{_lambda_.1} parent=39 // pred_check
          %p678 = pneg %p416
        $region90: #{_lambda_.1} parent=39 // pred_check_branch
          %680 = sbr.rel (%p678) target = $region92
        $region91: #{_lambda_.1} parent=39 // pred_region
          %p681 = scmp.lt.s32.totalorder %s38, 1
          %s682 = scalar_select %p681, %s38, 1
          %s683 = scalar_lea.vmem %s14, %s682
        $region92: #{_lambda_.1} parent=39 // pred_fallthru
          _
      $region40: #{_lambda_.1} parent=5 // pred_fallthru
        _
      %p684 = scmp.le.s32.totalorder 1, %s30
      %p685 = scmp.lt.s32.totalorder %s30, 5
      %p686 = pnand %p684, %p685
      %p687 = pneg %p686
      // Predicated region
      $region93: #{_lambda_.1} parent=5 // pred_check
        _
      $region94: #{_lambda_.1} parent=5 // pred_check_branch
        %689 = sbr.rel (%p686) target = $region96
      $region95: #{_lambda_.1} parent=5 // pred_region
        %s690 = ssub.s32 %s30, 1
        %p691 = scmp.lt.s32.totalorder %s39, 1
        %s692 = scalar_select %p691, %s39, 1
        %s693 = smul.addr %s692, 6
        %s694 = smul.addr %s693, 8
        %s695 = scalar_lea.vmem %s0, %s694
        %p696 = pneg %p68
        %p697 = pneg %p65
        %p698 = pneg %p89
        %p699 = pneg %p86
        %p700 = pneg %p110
        %p701 = pneg %p107
        %p702 = scmp.lt.s32.totalorder %s40, 1
        %s703 = scalar_select %p702, %s40, 1
        %s704 = scalar_lea.vmem %s3, %s703
        %p705 = pneg %p136
        %p706 = pneg %p133
        %p707 = scmp.lt.s32.totalorder %s40, 1
        %s708 = scalar_select %p707, %s40, 1
        %s709 = scalar_lea.vmem %s4, %s708
        %p710 = pneg %p162
        %p711 = pneg %p159
        %p712 = scmp.lt.s32.totalorder %s40, 1
        %s713 = scalar_select %p712, %s40, 1
        %s714 = smul.addr %s713, 8
        %s715 = smul.addr %s714, 4
        %s716 = scalar_lea.vmem %s5, %s715
        %p717 = pneg %p188
        %p718 = pneg %p185
        %p719 = scmp.lt.s32.totalorder %s40, 1
        %s720 = scalar_select %p719, %s40, 1
        %s721 = smul.addr %s720, 2
        %s722 = scalar_lea.vmem %s6, %s721
        %p723 = pneg %p214
        %p724 = pneg %p211
        %p725 = scmp.lt.s32.totalorder %s40, 1
        %s726 = scalar_select %p725, %s40, 1
        %s727 = smul.addr %s726, 4
        %s728 = smul.addr %s727, 4
        %s729 = scalar_lea.vmem %s7, %s728
        %p730 = pneg %p240
        %p731 = pneg %p237
        %p732 = scmp.lt.s32.totalorder %s40, 1
        %s733 = scalar_select %p732, %s40, 1
        %s734 = scalar_lea.vmem %s8, %s733
        %p735 = pneg %p266
        %p736 = pneg %p263
        %p737 = scmp.lt.s32.totalorder %s40, 1
        %s738 = scalar_select %p737, %s40, 1
        %s739 = scalar_lea.vmem %s9, %s738
        %p740 = pneg %p292
        %p741 = pneg %p289
        %p742 = scmp.lt.s32.totalorder %s40, 1
        %s743 = scalar_select %p742, %s40, 1
        %s744 = scalar_lea.vmem %s10, %s743
        %p745 = pneg %p318
        %p746 = pneg %p315
        %p747 = scmp.lt.s32.totalorder %s40, 1
        %s748 = scalar_select %p747, %s40, 1
        %s749 = smul.addr %s748, 4
        %s750 = smul.addr %s749, 4
        %s751 = scalar_lea.vmem %s11, %s750
        %p752 = pneg %p344
        %p753 = pneg %p341
        %p754 = scmp.lt.s32.totalorder %s40, 1
        %s755 = scalar_select %p754, %s40, 1
        %s756 = scalar_lea.vmem %s12, %s755
        %p757 = pneg %p370
        %p758 = pneg %p367
        %p759 = scmp.lt.s32.totalorder %s40, 1
        %s760 = scalar_select %p759, %s40, 1
        %s761 = smul.addr %s760, 8
        %s762 = smul.addr %s761, 4
        %s763 = scalar_lea.vmem %s13, %s762
        %p764 = pneg %p396
        %p765 = pneg %p393
        %p766 = scmp.lt.s32.totalorder %s40, 1
        %s767 = scalar_select %p766, %s40, 1
        %s768 = scalar_lea.vmem %s14, %s767
        %p769 = pneg %p422
        %p770 = pneg %p419
        %p771 = pneg %p443
        %p772 = pneg %p440
        %p773 = pneg %p464
        %p774 = pneg %p461
        %p775 = pneg %p485
        %p776 = pneg %p482
        %p777 = pneg %p506
        %p778 = pneg %p503
        %p779 = pneg %p532
        %p780 = pneg %p529
        %s781 = sand.u32 %s519, 1
        %s782 = scalar_lea.sflag [#allocation4], %s781
        %s783 = sand.u32 %s519, 1
        %s784 = scalar_lea.vmem [#allocation3], %s783
        %p785 = pneg %p558
        %p786 = pneg %p555
        %p787 = scmp.lt.s32.totalorder %s39, 1
        %s788 = scalar_select %p787, %s39, 1
        %s789 = smul.addr %s788, 8
        %s790 = scalar_lea.vmem %s20, %s789
        %p791 = scmp.lt.s32.totalorder %s39, 1
        %s792 = scalar_select %p791, %s39, 1
        %s793 = smul.addr %s792, 6
        %s794 = smul.addr %s793, 8
        %s795 = scalar_lea.vmem %s0, %s794
        %p796 = scmp.lt.s32.totalorder %s40, 1
        %s797 = scalar_select %p796, %s40, 1
        %s798 = scalar_lea.vmem %s3, %s797
        %p799 = scmp.lt.s32.totalorder %s40, 1
        %s800 = scalar_select %p799, %s40, 1
        %s801 = scalar_lea.vmem %s4, %s800
        %p802 = scmp.lt.s32.totalorder %s40, 1
        %s803 = scalar_select %p802, %s40, 1
        %s804 = smul.addr %s803, 8
        %s805 = smul.addr %s804, 4
        %s806 = scalar_lea.vmem %s5, %s805
        %p807 = scmp.lt.s32.totalorder %s40, 1
        %s808 = scalar_select %p807, %s40, 1
        %s809 = smul.addr %s808, 2
        %s810 = scalar_lea.vmem %s6, %s809
        %p811 = scmp.lt.s32.totalorder %s40, 1
        %s812 = scalar_select %p811, %s40, 1
        %s813 = smul.addr %s812, 4
        %s814 = smul.addr %s813, 4
        %s815 = scalar_lea.vmem %s7, %s814
        %p816 = scmp.lt.s32.totalorder %s40, 1
        %s817 = scalar_select %p816, %s40, 1
        %s818 = scalar_lea.vmem %s8, %s817
        %p819 = scmp.lt.s32.totalorder %s40, 1
        %s820 = scalar_select %p819, %s40, 1
        %s821 = scalar_lea.vmem %s9, %s820
        %p822 = scmp.lt.s32.totalorder %s40, 1
        %s823 = scalar_select %p822, %s40, 1
        %s824 = scalar_lea.vmem %s10, %s823
        %p825 = scmp.lt.s32.totalorder %s40, 1
        %s826 = scalar_select %p825, %s40, 1
        %s827 = smul.addr %s826, 4
        %s828 = smul.addr %s827, 4
        %s829 = scalar_lea.vmem %s11, %s828
        %p830 = scmp.lt.s32.totalorder %s40, 1
        %s831 = scalar_select %p830, %s40, 1
        %s832 = scalar_lea.vmem %s12, %s831
        %p833 = scmp.lt.s32.totalorder %s40, 1
        %s834 = scalar_select %p833, %s40, 1
        %s835 = smul.addr %s834, 8
        %s836 = smul.addr %s835, 4
        %s837 = scalar_lea.vmem %s13, %s836
        %p838 = scmp.lt.s32.totalorder %s40, 1
        %s839 = scalar_select %p838, %s40, 1
        %s840 = scalar_lea.vmem %s14, %s839
        %p841 = scmp.lt.s32.totalorder %s39, 1
        %s842 = scalar_select %p841, %s39, 1
        %s843 = smul.addr %s842, 8
        %s844 = scalar_lea.vmem %s20, %s843
        %p846 = scmp.eq.s32.totalorder %s40, 0
        // Predicated region
        $region97: #{_lambda_.1} parent=95 // pred_check
          %p847 = pneg %p846
        $region98: #{_lambda_.1} parent=95 // pred_check_branch
          %849 = sbr.rel (%p847) target = $region100
        $region99: #{_lambda_.1} parent=95 // pred_region
          %v850 = vld [vmem:[%s795] sm:$0x3f]
          %v851 = vld [vmem:[%s795 + $0x8] sm:$0x3f]
          %v852 = vld [vmem:[%s795 + $0x10] sm:$0x3f]
          %v853 = vld [vmem:[%s795 + $0x18] sm:$0x3f]
          %v854 = vld [vmem:[%s795 + $0x20] sm:$0x3f]
          %v855 = vld [vmem:[%s795 + $0x28] sm:$0x3f]
          %v856 = vpack.c.bf16 %v850, %v850
          %v857 = vpack.c.bf16 %v851, %v851
          %v858 = vpack.c.bf16 %v852, %v852
          %v859 = vpack.c.bf16 %v853, %v853
          %v860 = vpack.c.bf16 %v854, %v854
          %v861 = vpack.c.bf16 %v855, %v855
          %v862 = vld [vmem:[%s2] sm:$0xf]
          %v863 = vld [vmem:[%s2 + $0x4] sm:$0xf]
          %v864 = vld [vmem:[%s2 + $0x8] sm:$0xf]
          %v865 = vld [vmem:[%s2 + $0xc] sm:$0xf]
          %v866 = vld [vmem:[%s2 + $0x10] sm:$0xf]
          %v867 = vld [vmem:[%s2 + $0x14] sm:$0xf]
          %v868 = vld [vmem:[%s2 + $0x18] sm:$0xf]
          %v869 = vld [vmem:[%s2 + $0x1c] sm:$0xf]
          %v870 = vld [vmem:[%s2 + $0x20] sm:$0xf]
          %v871 = vld [vmem:[%s2 + $0x24] sm:$0xf]
          %v872 = vld [vmem:[%s2 + $0x28] sm:$0xf]
          %v873 = vld [vmem:[%s2 + $0x2c] sm:$0xf]
          %v874 = vld [vmem:[%s2 + $0x30] sm:$0xf]
          %v875 = vld [vmem:[%s2 + $0x34] sm:$0xf]
          %v876 = vld [vmem:[%s2 + $0x38] sm:$0xf]
          %v877 = vld [vmem:[%s2 + $0x3c] sm:$0xf]
          %v878 = vld [vmem:[%s2 + $0x40] sm:$0xf]
          %v879 = vld [vmem:[%s2 + $0x44] sm:$0xf]
          %v880 = vld [vmem:[%s2 + $0x48] sm:$0xf]
          %v881 = vld [vmem:[%s2 + $0x4c] sm:$0xf]
          %v882 = vld [vmem:[%s2 + $0x50] sm:$0xf]
          %v883 = vld [vmem:[%s2 + $0x54] sm:$0xf]
          %v884 = vld [vmem:[%s2 + $0x58] sm:$0xf]
          %v885 = vld [vmem:[%s2 + $0x5c] sm:$0xf]
          %v886 = vld [vmem:[%s2 + $0x60] sm:$0xf]
          %v887 = vld [vmem:[%s2 + $0x64] sm:$0xf]
          %v888 = vld [vmem:[%s2 + $0x68] sm:$0xf]
          %v889 = vld [vmem:[%s2 + $0x6c] sm:$0xf]
          %v890 = vld [vmem:[%s2 + $0x70] sm:$0xf]
          %v891 = vld [vmem:[%s2 + $0x74] sm:$0xf]
          %v892 = vld [vmem:[%s2 + $0x78] sm:$0xf]
          %v893 = vld [vmem:[%s2 + $0x7c] sm:$0xf]
          %v894 = vld [vmem:[%s2 + $0x80] sm:$0xf]
          %v895 = vld [vmem:[%s2 + $0x84] sm:$0xf]
          %v896 = vld [vmem:[%s2 + $0x88] sm:$0xf]
          %v897 = vld [vmem:[%s2 + $0x8c] sm:$0xf]
          %v898 = vld [vmem:[%s2 + $0x90] sm:$0xf]
          %v899 = vld [vmem:[%s2 + $0x94] sm:$0xf]
          %v900 = vld [vmem:[%s2 + $0x98] sm:$0xf]
          %v901 = vld [vmem:[%s2 + $0x9c] sm:$0xf]
          %v902 = vld [vmem:[%s2 + $0xa0] sm:$0xf]
          %v903 = vld [vmem:[%s2 + $0xa4] sm:$0xf]
          %v904 = vld [vmem:[%s2 + $0xa8] sm:$0xf]
          %v905 = vld [vmem:[%s2 + $0xac] sm:$0xf]
          %v906 = vld [vmem:[%s2 + $0xb0] sm:$0xf]
          %v907 = vld [vmem:[%s2 + $0xb4] sm:$0xf]
          %v908 = vld [vmem:[%s2 + $0xb8] sm:$0xf]
          %v909 = vld [vmem:[%s2 + $0xbc] sm:$0xf]
          %v910 = vld [vmem:[%s2 + $0xc0] sm:$0xf]
          %v911 = vld [vmem:[%s2 + $0xc4] sm:$0xf]
          %v912 = vld [vmem:[%s2 + $0xc8] sm:$0xf]
          %v913 = vld [vmem:[%s2 + $0xcc] sm:$0xf]
          %v914 = vld [vmem:[%s2 + $0xd0] sm:$0xf]
          %v915 = vld [vmem:[%s2 + $0xd4] sm:$0xf]
          %v916 = vld [vmem:[%s2 + $0xd8] sm:$0xf]
          %v917 = vld [vmem:[%s2 + $0xdc] sm:$0xf]
          %v918 = vld [vmem:[%s2 + $0xe0] sm:$0xf]
          %v919 = vld [vmem:[%s2 + $0xe4] sm:$0xf]
          %v920 = vld [vmem:[%s2 + $0xe8] sm:$0xf]
          %v921 = vld [vmem:[%s2 + $0xec] sm:$0xf]
          %v922 = vld [vmem:[%s2 + $0xf0] sm:$0xf]
          %v923 = vld [vmem:[%s2 + $0xf4] sm:$0xf]
          %v924 = vld [vmem:[%s2 + $0xf8] sm:$0xf]
          %v925 = vld [vmem:[%s2 + $0xfc] sm:$0xf]
          %v926 = vld [vmem:[%s2 + $0x100] sm:$0xf]
          %v927 = vld [vmem:[%s2 + $0x104] sm:$0xf]
          %v928 = vld [vmem:[%s2 + $0x108] sm:$0xf]
          %v929 = vld [vmem:[%s2 + $0x10c] sm:$0xf]
          %v930 = vld [vmem:[%s2 + $0x110] sm:$0xf]
          %v931 = vld [vmem:[%s2 + $0x114] sm:$0xf]
          %v932 = vld [vmem:[%s2 + $0x118] sm:$0xf]
          %v933 = vld [vmem:[%s2 + $0x11c] sm:$0xf]
          %v934 = vld [vmem:[%s2 + $0x120] sm:$0xf]
          %v935 = vld [vmem:[%s2 + $0x124] sm:$0xf]
          %v936 = vld [vmem:[%s2 + $0x128] sm:$0xf]
          %v937 = vld [vmem:[%s2 + $0x12c] sm:$0xf]
          %v938 = vld [vmem:[%s2 + $0x130] sm:$0xf]
          %v939 = vld [vmem:[%s2 + $0x134] sm:$0xf]
          %v940 = vld [vmem:[%s2 + $0x138] sm:$0xf]
          %v941 = vld [vmem:[%s2 + $0x13c] sm:$0xf]
          %v942 = vld [vmem:[%s2 + $0x140] sm:$0xf]
          %v943 = vld [vmem:[%s2 + $0x144] sm:$0xf]
          %v944 = vld [vmem:[%s2 + $0x148] sm:$0xf]
          %v945 = vld [vmem:[%s2 + $0x14c] sm:$0xf]
          %v946 = vld [vmem:[%s2 + $0x150] sm:$0xf]
          %v947 = vld [vmem:[%s2 + $0x154] sm:$0xf]
          %v948 = vld [vmem:[%s2 + $0x158] sm:$0xf]
          %v949 = vld [vmem:[%s2 + $0x15c] sm:$0xf]
          %v950 = vld [vmem:[%s2 + $0x160] sm:$0xf]
          %v951 = vld [vmem:[%s2 + $0x164] sm:$0xf]
          %v952 = vld [vmem:[%s2 + $0x168] sm:$0xf]
          %v953 = vld [vmem:[%s2 + $0x16c] sm:$0xf]
          %v954 = vld [vmem:[%s2 + $0x170] sm:$0xf]
          %v955 = vld [vmem:[%s2 + $0x174] sm:$0xf]
          %v956 = vld [vmem:[%s2 + $0x178] sm:$0xf]
          %v957 = vld [vmem:[%s2 + $0x17c] sm:$0xf]
          %v958 = vld [vmem:[%s1] sm:$0x3f]
          %v1055 = vunpack.c.l.b16 %v862
          %v1056 = vunpack.c.l.b16 %v863
          %v1057 = vunpack.c.l.b16 %v864
          %v1058 = vunpack.c.l.b16 %v865
          %v1059 = vunpack.c.l.b16 %v866
          %v1060 = vunpack.c.l.b16 %v867
          %v1061 = vunpack.c.l.b16 %v868
          %v1062 = vunpack.c.l.b16 %v869
          %v1063 = vunpack.c.l.b16 %v870
          %v1064 = vunpack.c.l.b16 %v871
          %v1065 = vunpack.c.l.b16 %v872
          %v1066 = vunpack.c.l.b16 %v873
          %v1067 = vunpack.c.l.b16 %v874
          %v1068 = vunpack.c.l.b16 %v875
          %v1069 = vunpack.c.l.b16 %v876
          %v1070 = vunpack.c.l.b16 %v877
          %v1071 = vunpack.c.l.b16 %v878
          %v1072 = vunpack.c.l.b16 %v879
          %v1073 = vunpack.c.l.b16 %v880
          %v1074 = vunpack.c.l.b16 %v881
          %v1075 = vunpack.c.l.b16 %v882
          %v1076 = vunpack.c.l.b16 %v883
          %v1077 = vunpack.c.l.b16 %v884
          %v1078 = vunpack.c.l.b16 %v885
          %v1079 = vunpack.c.l.b16 %v886
          %v1080 = vunpack.c.l.b16 %v887
          %v1081 = vunpack.c.l.b16 %v888
          %v1082 = vunpack.c.l.b16 %v889
          %v1083 = vunpack.c.l.b16 %v890
          %v1084 = vunpack.c.l.b16 %v891
          %v1085 = vunpack.c.l.b16 %v892
          %v1086 = vunpack.c.l.b16 %v893
          %v1087 = vunpack.c.l.b16 %v894
          %v1088 = vunpack.c.l.b16 %v895
          %v1089 = vunpack.c.l.b16 %v896
          %v1090 = vunpack.c.l.b16 %v897
          %v1091 = vunpack.c.l.b16 %v898
          %v1092 = vunpack.c.l.b16 %v899
          %v1093 = vunpack.c.l.b16 %v900
          %v1094 = vunpack.c.l.b16 %v901
          %v1095 = vunpack.c.l.b16 %v902
          %v1096 = vunpack.c.l.b16 %v903
          %v1097 = vunpack.c.l.b16 %v904
          %v1098 = vunpack.c.l.b16 %v905
          %v1099 = vunpack.c.l.b16 %v906
          %v1100 = vunpack.c.l.b16 %v907
          %v1101 = vunpack.c.l.b16 %v908
          %v1102 = vunpack.c.l.b16 %v909
          %v1103 = vunpack.c.l.b16 %v910
          %v1104 = vunpack.c.l.b16 %v911
          %v1105 = vunpack.c.l.b16 %v912
          %v1106 = vunpack.c.l.b16 %v913
          %v1107 = vunpack.c.l.b16 %v914
          %v1108 = vunpack.c.l.b16 %v915
          %v1109 = vunpack.c.l.b16 %v916
          %v1110 = vunpack.c.l.b16 %v917
          %v1111 = vunpack.c.l.b16 %v918
          %v1112 = vunpack.c.l.b16 %v919
          %v1113 = vunpack.c.l.b16 %v920
          %v1114 = vunpack.c.l.b16 %v921
          %v1115 = vunpack.c.l.b16 %v922
          %v1116 = vunpack.c.l.b16 %v923
          %v1117 = vunpack.c.l.b16 %v924
          %v1118 = vunpack.c.l.b16 %v925
          %v1119 = vunpack.c.l.b16 %v926
          %v1120 = vunpack.c.l.b16 %v927
          %v1121 = vunpack.c.l.b16 %v928
          %v1122 = vunpack.c.l.b16 %v929
          %v1123 = vunpack.c.l.b16 %v930
          %v1124 = vunpack.c.l.b16 %v931
          %v1125 = vunpack.c.l.b16 %v932
          %v1126 = vunpack.c.l.b16 %v933
          %v1127 = vunpack.c.l.b16 %v934
          %v1128 = vunpack.c.l.b16 %v935
          %v1129 = vunpack.c.l.b16 %v936
          %v1130 = vunpack.c.l.b16 %v937
          %v1131 = vunpack.c.l.b16 %v938
          %v1132 = vunpack.c.l.b16 %v939
          %v1133 = vunpack.c.l.b16 %v940
          %v1134 = vunpack.c.l.b16 %v941
          %v1135 = vunpack.c.l.b16 %v942
          %v1136 = vunpack.c.l.b16 %v943
          %v1137 = vunpack.c.l.b16 %v944
          %v1138 = vunpack.c.l.b16 %v945
          %v1139 = vunpack.c.l.b16 %v946
          %v1140 = vunpack.c.l.b16 %v947
          %v1141 = vunpack.c.l.b16 %v948
          %v1142 = vunpack.c.l.b16 %v949
          %v1143 = vunpack.c.l.b16 %v950
          %v1144 = vunpack.c.l.b16 %v951
          %v1145 = vunpack.c.l.b16 %v952
          %v1146 = vunpack.c.l.b16 %v953
          %v1147 = vunpack.c.l.b16 %v954
          %v1148 = vunpack.c.l.b16 %v955
          %v1149 = vunpack.c.l.b16 %v956
          %v1150 = vunpack.c.l.b16 %v957
          %v1151 = vpack.c.b16 %v1056, %v1055
          %v1152 = vpack.c.b16 %v1058, %v1057
          %v1153 = vpack.c.b16 %v1060, %v1059
          %v1154 = vpack.c.b16 %v1062, %v1061
          %v1155 = vpack.c.b16 %v1064, %v1063
          %v1156 = vpack.c.b16 %v1066, %v1065
          %v1157 = vpack.c.b16 %v1068, %v1067
          %v1158 = vpack.c.b16 %v1070, %v1069
          %v1159 = vpack.c.b16 %v1072, %v1071
          %v1160 = vpack.c.b16 %v1074, %v1073
          %v1161 = vpack.c.b16 %v1076, %v1075
          %v1162 = vpack.c.b16 %v1078, %v1077
          %v1163 = vpack.c.b16 %v1080, %v1079
          %v1164 = vpack.c.b16 %v1082, %v1081
          %v1165 = vpack.c.b16 %v1084, %v1083
          %v1166 = vpack.c.b16 %v1086, %v1085
          %v1167 = vpack.c.b16 %v1088, %v1087
          %v1168 = vpack.c.b16 %v1090, %v1089
          %v1169 = vpack.c.b16 %v1092, %v1091
          %v1170 = vpack.c.b16 %v1094, %v1093
          %v1171 = vpack.c.b16 %v1096, %v1095
          %v1172 = vpack.c.b16 %v1098, %v1097
          %v1173 = vpack.c.b16 %v1100, %v1099
          %v1174 = vpack.c.b16 %v1102, %v1101
          %v1175 = vpack.c.b16 %v1104, %v1103
          %v1176 = vpack.c.b16 %v1106, %v1105
          %v1177 = vpack.c.b16 %v1108, %v1107
          %v1178 = vpack.c.b16 %v1110, %v1109
          %v1179 = vpack.c.b16 %v1112, %v1111
          %v1180 = vpack.c.b16 %v1114, %v1113
          %v1181 = vpack.c.b16 %v1116, %v1115
          %v1182 = vpack.c.b16 %v1118, %v1117
          %v1183 = vpack.c.b16 %v1120, %v1119
          %v1184 = vpack.c.b16 %v1122, %v1121
          %v1185 = vpack.c.b16 %v1124, %v1123
          %v1186 = vpack.c.b16 %v1126, %v1125
          %v1187 = vpack.c.b16 %v1128, %v1127
          %v1188 = vpack.c.b16 %v1130, %v1129
          %v1189 = vpack.c.b16 %v1132, %v1131
          %v1190 = vpack.c.b16 %v1134, %v1133
          %v1191 = vpack.c.b16 %v1136, %v1135
          %v1192 = vpack.c.b16 %v1138, %v1137
          %v1193 = vpack.c.b16 %v1140, %v1139
          %v1194 = vpack.c.b16 %v1142, %v1141
          %v1195 = vpack.c.b16 %v1144, %v1143
          %v1196 = vpack.c.b16 %v1146, %v1145
          %v1197 = vpack.c.b16 %v1148, %v1147
          %v1198 = vpack.c.b16 %v1150, %v1149
          %1247 = vmatprep.subr.bf16.mxu0 0
          %1248 = vmatpush1.bf16.msra.mxu0 %v1151
          %1249 = vmatprep.subr.bf16.mxu0 0
          %1250 = vmatpush1.bf16.msra.mxu0 %v1152
          %1251 = vmatprep.subr.bf16.mxu0 0
          %1252 = vmatpush1.bf16.msra.mxu0 %v1153
          %1253 = vmatprep.subr.bf16.mxu0 0
          %1254 = vmatpush1.bf16.msra.mxu0 %v1154
          %1255 = vmatprep.subr.bf16.mxu0 0
          %1256 = vmatpush1.bf16.msra.mxu0 %v1155
          %1257 = vmatprep.subr.bf16.mxu0 0
          %1258 = vmatpush1.bf16.msra.mxu0 %v1156
          %1259 = vmatprep.subr.bf16.mxu0 0
          %1260 = vmatpush1.bf16.msra.mxu0 %v1157
          %1261 = vmatprep.subr.bf16.mxu0 0
          %1262 = vmatpush1.bf16.msra.mxu0 %v1158
          %1263 = vmatprep.subr.bf16.mxu0 0
          %1264 = vmatpush1.bf16.msra.mxu0 %v1159
          %1265 = vmatprep.subr.bf16.mxu0 0
          %1266 = vmatpush1.bf16.msra.mxu0 %v1160
          %1267 = vmatprep.subr.bf16.mxu0 0
          %1268 = vmatpush1.bf16.msra.mxu0 %v1161
          %1269 = vmatprep.subr.bf16.mxu0 0
          %1270 = vmatpush1.bf16.msra.mxu0 %v1162
          %1271 = vmatprep.subr.bf16.mxu0 0
          %1272 = vmatpush1.bf16.msra.mxu0 %v1163
          %1273 = vmatprep.subr.bf16.mxu0 0
          %1274 = vmatpush1.bf16.msra.mxu0 %v1164
          %1275 = vmatprep.subr.bf16.mxu0 0
          %1276 = vmatpush1.bf16.msra.mxu0 %v1165
          %1277 = vmatprep.subr.bf16.mxu0 0
          %1278 = vmatpush1.bf16.msra.mxu0 %v1166
          %1279 = vmatprep.mubr.bf16.mxu0 %v857
          %1280 = vmatmul.mubr.bf16.gmra.mrb[0].mxu0 %v856
          %v1281 = vpop.f32.mrb[0].mxu0
          %v1282 = vadd.f32 %v958, %v1281
          %v1283 = vpop.f32.mrb[0].mxu0
          %v1284 = vpop.f32.mrb[0].mxu0
          %v1285 = vpop.f32.mrb[0].mxu0
          %1286 = vdwg.mxu0
          %1287 = vmatprep.subr.bf16.mxu0 0
          %1288 = vmatpush1.bf16.msra.mxu0 %v1167
          %1289 = vmatprep.subr.bf16.mxu0 0
          %1290 = vmatpush1.bf16.msra.mxu0 %v1168
          %1291 = vmatprep.subr.bf16.mxu0 0
          %1292 = vmatpush1.bf16.msra.mxu0 %v1169
          %1293 = vmatprep.subr.bf16.mxu0 0
          %1294 = vmatpush1.bf16.msra.mxu0 %v1170
          %1295 = vmatprep.subr.bf16.mxu0 0
          %1296 = vmatpush1.bf16.msra.mxu0 %v1171
          %1297 = vmatprep.subr.bf16.mxu0 0
          %1298 = vmatpush1.bf16.msra.mxu0 %v1172
          %1299 = vmatprep.subr.bf16.mxu0 0
          %1300 = vmatpush1.bf16.msra.mxu0 %v1173
          %1301 = vmatprep.subr.bf16.mxu0 0
          %1302 = vmatpush1.bf16.msra.mxu0 %v1174
          %1303 = vmatprep.subr.bf16.mxu0 0
          %1304 = vmatpush1.bf16.msra.mxu0 %v1175
          %1305 = vmatprep.subr.bf16.mxu0 0
          %1306 = vmatpush1.bf16.msra.mxu0 %v1176
          %1307 = vmatprep.subr.bf16.mxu0 0
          %1308 = vmatpush1.bf16.msra.mxu0 %v1177
          %1309 = vmatprep.subr.bf16.mxu0 0
          %1310 = vmatpush1.bf16.msra.mxu0 %v1178
          %1311 = vmatprep.subr.bf16.mxu0 0
          %1312 = vmatpush1.bf16.msra.mxu0 %v1179
          %1313 = vmatprep.subr.bf16.mxu0 0
          %1314 = vmatpush1.bf16.msra.mxu0 %v1180
          %1315 = vmatprep.subr.bf16.mxu0 0
          %1316 = vmatpush1.bf16.msra.mxu0 %v1181
          %1317 = vmatprep.subr.bf16.mxu0 0
          %1318 = vmatpush1.bf16.msra.mxu0 %v1182
          %1319 = vmatprep.mubr.bf16.mxu0 %v859
          %1320 = vmatmul.mubr.bf16.gmra.mrb[0].mxu0 %v858
          %v1321 = vpop.f32.mrb[0].mxu0
          %v1322 = vadd.f32 %v1282, %v1321
          %v1323 = vpop.f32.mrb[0].mxu0
          %v1324 = vpop.f32.mrb[0].mxu0
          %v1325 = vpop.f32.mrb[0].mxu0
          %1326 = vdwg.mxu0
          %1327 = vmatprep.subr.bf16.mxu0 0
          %1328 = vmatpush1.bf16.msra.mxu0 %v1183
          %1329 = vmatprep.subr.bf16.mxu0 0
          %1330 = vmatpush1.bf16.msra.mxu0 %v1184
          %1331 = vmatprep.subr.bf16.mxu0 0
          %1332 = vmatpush1.bf16.msra.mxu0 %v1185
          %1333 = vmatprep.subr.bf16.mxu0 0
          %1334 = vmatpush1.bf16.msra.mxu0 %v1186
          %1335 = vmatprep.subr.bf16.mxu0 0
          %1336 = vmatpush1.bf16.msra.mxu0 %v1187
          %1337 = vmatprep.subr.bf16.mxu0 0
          %1338 = vmatpush1.bf16.msra.mxu0 %v1188
          %1339 = vmatprep.subr.bf16.mxu0 0
          %1340 = vmatpush1.bf16.msra.mxu0 %v1189
          %1341 = vmatprep.subr.bf16.mxu0 0
          %1342 = vmatpush1.bf16.msra.mxu0 %v1190
          %1343 = vmatprep.subr.bf16.mxu0 0
          %1344 = vmatpush1.bf16.msra.mxu0 %v1191
          %1345 = vmatprep.subr.bf16.mxu0 0
          %1346 = vmatpush1.bf16.msra.mxu0 %v1192
          %1347 = vmatprep.subr.bf16.mxu0 0
          %1348 = vmatpush1.bf16.msra.mxu0 %v1193
          %1349 = vmatprep.subr.bf16.mxu0 0
          %1350 = vmatpush1.bf16.msra.mxu0 %v1194
          %1351 = vmatprep.subr.bf16.mxu0 0
          %1352 = vmatpush1.bf16.msra.mxu0 %v1195
          %1353 = vmatprep.subr.bf16.mxu0 0
          %1354 = vmatpush1.bf16.msra.mxu0 %v1196
          %1355 = vmatprep.subr.bf16.mxu0 0
          %1356 = vmatpush1.bf16.msra.mxu0 %v1197
          %1357 = vmatprep.subr.bf16.mxu0 0
          %1358 = vmatpush1.bf16.msra.mxu0 %v1198
          %1359 = vmatprep.mubr.bf16.mxu0 %v861
          %1360 = vmatmul.mubr.bf16.gmra.mrb[0].mxu0 %v860
          %v1361 = vpop.f32.mrb[0].mxu0
          %v1362 = vadd.f32 %v1322, %v1361
          %v1363 = vpop.f32.mrb[0].mxu0
          %v1364 = vpop.f32.mrb[0].mxu0
          %v1365 = vpop.f32.mrb[0].mxu0
          %1366 = vdwg.mxu0
          %vm1367 = vcmask 259072
          %1368 = vst.msk [vmem:[#allocation2] sm:$0x3f] %vm1367, %v1362
        $region100: #{_lambda_.1} parent=95 // pred_fallthru
          _
        %v1369 = vld [vmem:[#allocation2] sm:$0x3f]
        %v1370 = vld [vmem:[%s798] sm:$0x1]
        %v1371 = vld [vmem:[%s801] sm:$0x1]
        %vm1372 = vcmask 259072
        %v1373 = vsel %vm1372, %v1369, 0.0
        %1374 = vadd.xlane.f32.xlu0 %v1373
        %v1375 = vpop.xlane.xlu0 %1374
        %v1376 = vrcp.pop 32.0
        %v1377 = vmul.f32 %v1375, %v1376
        %v1378 = vsub.f32 %v1369, %v1377
        %v1379 = vmul.f32 %v1378, %v1378
        %v1380 = vsel %vm1372, %v1379, 0.0
        %1381 = vadd.xlane.f32.xlu0 %v1380
        %v1382 = vpop.xlane.xlu0 %1381
        %v1383 = vmul.f32 %v1382, %v1376
        %v1384 = vadd.f32 %v1383, 1e-12
        %v1385 = vrsqrt.pop %v1384
        %v1386 = vmul.f32 %v1378, %v1385
        %v1388 = vlaneseq
        %v1389 = vshrl.u32 %v1388, 7
        %v1390 = vsub.s32 0, %v1389
        %v1391 = vrot.slane %v1370, %v1390
        %v1393 = vmul.f32 %v1386, %v1391
        %v1395 = vlaneseq
        %v1396 = vshrl.u32 %v1395, 7
        %v1397 = vsub.s32 0, %v1396
        %v1398 = vrot.slane %v1371, %v1397
        %v1400 = vadd.f32 %v1393, %v1398
        %v1401 = vpack.c.bf16 %v1400, %v1400
        %v1402 = vld [vmem:[%s806] sm:$0xf]
        %v1403 = vld [vmem:[%s806 + $0x4] sm:$0xf]
        %v1404 = vld [vmem:[%s806 + $0x8] sm:$0xf]
        %v1405 = vld [vmem:[%s806 + $0xc] sm:$0xf]
        %v1406 = vld [vmem:[%s806 + $0x10] sm:$0xf]
        %v1407 = vld [vmem:[%s806 + $0x14] sm:$0xf]
        %v1408 = vld [vmem:[%s806 + $0x18] sm:$0xf]
        %v1409 = vld [vmem:[%s806 + $0x1c] sm:$0xf]
        %v1410 = vld [vmem:[%s810] sm:$0x1]
        %v1411 = vld [vmem:[%s810 + $0x1] sm:$0x1]
        %v1414 = vlaneseq
        %v1415 = vshrl.u32 %v1414, 7
        %v1416 = vsub.s32 0, %v1415
        %v1417 = vrot.slane %v1410, %v1416
        %v1418 = vlaneseq
        %v1419 = vshrl.u32 %v1418, 7
        %v1420 = vsub.s32 0, %v1419
        %v1421 = vrot.slane %v1411, %v1420
        %v1428 = vunpack.c.l.b16 %v1402
        %v1429 = vunpack.c.l.b16 %v1403
        %v1430 = vunpack.c.l.b16 %v1404
        %v1431 = vunpack.c.l.b16 %v1405
        %v1432 = vpack.c.b16 %v1429, %v1428
        %v1433 = vpack.c.b16 %v1431, %v1430
        %vm1436 = vcmask 261120
        %v1438 = vsel %vm1436, %v1401, 0
        %1440 = vmatprep.subr.bf16.mxu0 0
        %1441 = vmatpush1.bf16.msra.mxu0 %v1432
        %1442 = vmatprep.subr.bf16.mxu0 0
        %1443 = vmatpush1.bf16.msra.mxu0 %v1433
        %1444 = vmatprep.subr.bf16.mxu0 0
        %1445 = vmatpush1.bf16.msra.mxu0 0
        %1446 = vmatprep.subr.bf16.mxu0 0
        %1447 = vmatpush1.bf16.msra.mxu0 0
        %1448 = vmatprep.subr.bf16.mxu0 0
        %1449 = vmatpush1.bf16.msra.mxu0 0
        %1450 = vmatprep.subr.bf16.mxu0 0
        %1451 = vmatpush1.bf16.msra.mxu0 0
        %1452 = vmatprep.subr.bf16.mxu0 0
        %1453 = vmatpush1.bf16.msra.mxu0 0
        %1454 = vmatprep.subr.bf16.mxu0 0
        %1455 = vmatpush1.bf16.msra.mxu0 0
        %1456 = vmatprep.subr.bf16.mxu0 0
        %1457 = vmatpush1.bf16.msra.mxu0 0
        %1458 = vmatprep.subr.bf16.mxu0 0
        %1459 = vmatpush1.bf16.msra.mxu0 0
        %1460 = vmatprep.subr.bf16.mxu0 0
        %1461 = vmatpush1.bf16.msra.mxu0 0
        %1462 = vmatprep.subr.bf16.mxu0 0
        %1463 = vmatpush1.bf16.msra.mxu0 0
        %1464 = vmatprep.subr.bf16.mxu0 0
        %1465 = vmatpush1.bf16.msra.mxu0 0
        %1466 = vmatprep.subr.bf16.mxu0 0
        %1467 = vmatpush1.bf16.msra.mxu0 0
        %1468 = vmatprep.subr.bf16.mxu0 0
        %1469 = vmatpush1.bf16.msra.mxu0 0
        %1470 = vmatprep.subr.bf16.mxu0 0
        %1471 = vmatpush1.bf16.msra.mxu0 0
        %1472 = vmatprep.mubr.bf16.mxu0 0
        %1473 = vmatmul.mubr.bf16.gmra.mrb[0].mxu0 %v1438
        %v1474 = vpop.f32.mrb[0].mxu0
        %v1475 = vadd.f32 %v1417, %v1474
        %v1476 = vpop.f32.mrb[0].mxu0
        %v1477 = vpop.f32.mrb[0].mxu0
        %v1478 = vpop.f32.mrb[0].mxu0
        %1479 = vdwg.mxu0
        %v1484 = vunpack.c.l.b16 %v1406
        %v1485 = vunpack.c.l.b16 %v1407
        %v1486 = vunpack.c.l.b16 %v1408
        %v1487 = vunpack.c.l.b16 %v1409
        %v1488 = vpack.c.b16 %v1485, %v1484
        %v1489 = vpack.c.b16 %v1487, %v1486
        %1492 = vmatprep.subr.bf16.mxu0 0
        %1493 = vmatpush1.bf16.msra.mxu0 %v1488
        %1494 = vmatprep.subr.bf16.mxu0 0
        %1495 = vmatpush1.bf16.msra.mxu0 %v1489
        %1496 = vmatprep.subr.bf16.mxu0 0
        %1497 = vmatpush1.bf16.msra.mxu0 0
        %1498 = vmatprep.subr.bf16.mxu0 0
        %1499 = vmatpush1.bf16.msra.mxu0 0
        %1500 = vmatprep.subr.bf16.mxu0 0
        %1501 = vmatpush1.bf16.msra.mxu0 0
        %1502 = vmatprep.subr.bf16.mxu0 0
        %1503 = vmatpush1.bf16.msra.mxu0 0
        %1504 = vmatprep.subr.bf16.mxu0 0
        %1505 = vmatpush1.bf16.msra.mxu0 0
        %1506 = vmatprep.subr.bf16.mxu0 0
        %1507 = vmatpush1.bf16.msra.mxu0 0
        %1508 = vmatprep.subr.bf16.mxu0 0
        %1509 = vmatpush1.bf16.msra.mxu0 0
        %1510 = vmatprep.subr.bf16.mxu0 0
        %1511 = vmatpush1.bf16.msra.mxu0 0
        %1512 = vmatprep.subr.bf16.mxu0 0
        %1513 = vmatpush1.bf16.msra.mxu0 0
        %1514 = vmatprep.subr.bf16.mxu0 0
        %1515 = vmatpush1.bf16.msra.mxu0 0
        %1516 = vmatprep.subr.bf16.mxu0 0
        %1517 = vmatpush1.bf16.msra.mxu0 0
        %1518 = vmatprep.subr.bf16.mxu0 0
        %1519 = vmatpush1.bf16.msra.mxu0 0
        %1520 = vmatprep.subr.bf16.mxu0 0
        %1521 = vmatpush1.bf16.msra.mxu0 0
        %1522 = vmatprep.subr.bf16.mxu0 0
        %1523 = vmatpush1.bf16.msra.mxu0 0
        %1524 = vmatprep.mubr.bf16.mxu0 0
        %1525 = vmatmul.mubr.bf16.gmra.mrb[0].mxu0 %v1438
        %v1526 = vpop.f32.mrb[0].mxu0
        %v1527 = vadd.f32 %v1421, %v1526
        %v1528 = vpop.f32.mrb[0].mxu0
        %v1529 = vpop.f32.mrb[0].mxu0
        %v1530 = vpop.f32.mrb[0].mxu0
        %1531 = vdwg.mxu0
        %v1532 = vpack.c.bf16 %v1475, %v1475
        %v1533 = vpack.c.bf16 %v1527, %v1527
        %1535 = vrot.lane.b32.xlu0 %v1532, 112
        %v1536 = vpop.permute.xlu0 %1535
        %vm1537 = vcmask 130048
        %v1539 = vsel %vm1537, %v1532, 0
        %v1542 = vsel %vm1537, %v1536, 0
        %1544 = vmatprep.subr.bf16.mxu0 0
        %1545 = vmatpush1.bf16.xpose.msra.mxu0 %v1542
        %1546 = vmatprep.subr.bf16.mxu0 0
        %1547 = vmatpush1.bf16.xpose.msra.mxu0 0
        %1548 = vmatprep.subr.bf16.mxu0 0
        %1549 = vmatpush1.bf16.xpose.msra.mxu0 0
        %1550 = vmatprep.subr.bf16.mxu0 0
        %1551 = vmatpush1.bf16.xpose.msra.mxu0 0
        %1552 = vmatprep.subr.bf16.mxu0 0
        %1553 = vmatpush1.bf16.xpose.msra.mxu0 0
        %1554 = vmatprep.subr.bf16.mxu0 0
        %1555 = vmatpush1.bf16.xpose.msra.mxu0 0
        %1556 = vmatprep.subr.bf16.mxu0 0
        %1557 = vmatpush1.bf16.xpose.msra.mxu0 0
        %1558 = vmatprep.subr.bf16.mxu0 0
        %1559 = vmatpush1.bf16.xpose.msra.mxu0 0
        %1560 = vmatprep.subr.bf16.mxu0 0
        %1561 = vmatpush1.bf16.xpose.msra.mxu0 0
        %1562 = vmatprep.subr.bf16.mxu0 0
        %1563 = vmatpush1.bf16.xpose.msra.mxu0 0
        %1564 = vmatprep.subr.bf16.mxu0 0
        %1565 = vmatpush1.bf16.xpose.msra.mxu0 0
        %1566 = vmatprep.subr.bf16.mxu0 0
        %1567 = vmatpush1.bf16.xpose.msra.mxu0 0
        %1568 = vmatprep.subr.bf16.mxu0 0
        %1569 = vmatpush1.bf16.xpose.msra.mxu0 0
        %1570 = vmatprep.subr.bf16.mxu0 0
        %1571 = vmatpush1.bf16.xpose.msra.mxu0 0
        %1572 = vmatprep.subr.bf16.mxu0 0
        %1573 = vmatpush1.bf16.xpose.msra.mxu0 0
        %1574 = vmatprep.subr.bf16.mxu0 0
        %1575 = vmatpush1.bf16.xpose.msra.mxu0 0
        %1576 = vmatprep.mubr.bf16.mxu0 0
        %1577 = vmatmul.mubr.bf16.gmra.mrb[0].mxu0 %v1539
        %v1578 = vpop.f32.mrb[0].mxu0
        %v1579 = vadd.f32 0.0, %v1578
        %v1580 = vpop.f32.mrb[0].mxu0
        %v1581 = vpop.f32.mrb[0].mxu0
        %v1582 = vpop.f32.mrb[0].mxu0
        %1583 = vdwg.mxu0
        %1585 = vrot.lane.b32.xlu0 %v1533, 112
        %v1586 = vpop.permute.xlu0 %1585
        %v1588 = vsel %vm1537, %v1533, 0
        %v1591 = vsel %vm1537, %v1586, 0
        %1593 = vmatprep.subr.bf16.mxu0 0
        %1594 = vmatpush1.bf16.xpose.msra.mxu0 %v1591
        %1595 = vmatprep.subr.bf16.mxu0 0
        %1596 = vmatpush1.bf16.xpose.msra.mxu0 0
        %1597 = vmatprep.subr.bf16.mxu0 0
        %1598 = vmatpush1.bf16.xpose.msra.mxu0 0
        %1599 = vmatprep.subr.bf16.mxu0 0
        %1600 = vmatpush1.bf16.xpose.msra.mxu0 0
        %1601 = vmatprep.subr.bf16.mxu0 0
        %1602 = vmatpush1.bf16.xpose.msra.mxu0 0
        %1603 = vmatprep.subr.bf16.mxu0 0
        %1604 = vmatpush1.bf16.xpose.msra.mxu0 0
        %1605 = vmatprep.subr.bf16.mxu0 0
        %1606 = vmatpush1.bf16.xpose.msra.mxu0 0
        %1607 = vmatprep.subr.bf16.mxu0 0
        %1608 = vmatpush1.bf16.xpose.msra.mxu0 0
        %1609 = vmatprep.subr.bf16.mxu0 0
        %1610 = vmatpush1.bf16.xpose.msra.mxu0 0
        %1611 = vmatprep.subr.bf16.mxu0 0
        %1612 = vmatpush1.bf16.xpose.msra.mxu0 0
        %1613 = vmatprep.subr.bf16.mxu0 0
        %1614 = vmatpush1.bf16.xpose.msra.mxu0 0
        %1615 = vmatprep.subr.bf16.mxu0 0
        %1616 = vmatpush1.bf16.xpose.msra.mxu0 0
        %1617 = vmatprep.subr.bf16.mxu0 0
        %1618 = vmatpush1.bf16.xpose.msra.mxu0 0
        %1619 = vmatprep.subr.bf16.mxu0 0
        %1620 = vmatpush1.bf16.xpose.msra.mxu0 0
        %1621 = vmatprep.subr.bf16.mxu0 0
        %1622 = vmatpush1.bf16.xpose.msra.mxu0 0
        %1623 = vmatprep.subr.bf16.mxu0 0
        %1624 = vmatpush1.bf16.xpose.msra.mxu0 0
        %1625 = vmatprep.mubr.bf16.mxu0 0
        %1626 = vmatmul.mubr.bf16.gmra.mrb[0].mxu0 %v1588
        %v1627 = vpop.f32.mrb[0].mxu0
        %v1628 = vadd.f32 0.0, %v1627
        %v1629 = vpop.f32.mrb[0].mxu0
        %v1630 = vpop.f32.mrb[0].mxu0
        %v1631 = vpop.f32.mrb[0].mxu0
        %1632 = vdwg.mxu0
        %v1633 = vmul.f32 %v1579, 0.25
        %v1634 = vmul.f32 %v1628, 0.25
        %vm1635 = vcmask 46080
        %v1636 = vsel %vm1635, %v1633, -inf
        %1637 = vmax.xlane.f32.xlu0 %v1636
        %v1638 = vpop.xlane.xlu0 %1637
        %v1639 = vsel %vm1635, %v1634, -inf
        %1640 = vmax.xlane.f32.xlu0 %v1639
        %v1641 = vpop.xlane.xlu0 %1640
        %v1642 = vsub.f32 %v1633, %v1638
        %v1643 = vsub.f32 %v1634, %v1641
        %v1644 = vmul.f32 %v1642, 1.442695
        %v1645 = vpow.pop %v1644
        %v1646 = vmul.f32 %v1643, 1.442695
        %v1647 = vpow.pop %v1646
        %v1648 = vsel %vm1635, %v1645, 0.0
        %1649 = vadd.xlane.f32.xlu0 %v1648
        %v1650 = vpop.xlane.xlu0 %1649
        %v1651 = vsel %vm1635, %v1647, 0.0
        %1652 = vadd.xlane.f32.xlu0 %v1651
        %v1653 = vpop.xlane.xlu0 %1652
        %v1654 = vrcp.pop %v1650
        %v1655 = vrcp.pop %v1653
        %v1656 = vmul.f32 %v1645, %v1654
        %v1657 = vmul.f32 %v1647, %v1655
        %v1658 = vpack.c.bf16 %v1656, %v1656
        %v1659 = vpack.c.bf16 %v1657, %v1657
        %1660 = vrot.lane.b32.xlu0 %v1532, 96
        %v1661 = vpop.permute.xlu0 %1660
        %vm1662 = vcmask 48128
        %v1664 = vsel %vm1662, %v1658, 0
        %vm1666 = vcmask 1042432
        %v1668 = vsel %vm1666, %v1661, 0
        %1670 = vmatprep.subr.bf16.mxu0 0
        %1671 = vmatpush1.bf16.msra.mxu0 %v1668
        %1672 = vmatprep.subr.bf16.mxu0 0
        %1673 = vmatpush1.bf16.msra.mxu0 0
        %1674 = vmatprep.subr.bf16.mxu0 0
        %1675 = vmatpush1.bf16.msra.mxu0 0
        %1676 = vmatprep.subr.bf16.mxu0 0
        %1677 = vmatpush1.bf16.msra.mxu0 0
        %1678 = vmatprep.subr.bf16.mxu0 0
        %1679 = vmatpush1.bf16.msra.mxu0 0
        %1680 = vmatprep.subr.bf16.mxu0 0
        %1681 = vmatpush1.bf16.msra.mxu0 0
        %1682 = vmatprep.subr.bf16.mxu0 0
        %1683 = vmatpush1.bf16.msra.mxu0 0
        %1684 = vmatprep.subr.bf16.mxu0 0
        %1685 = vmatpush1.bf16.msra.mxu0 0
        %1686 = vmatprep.subr.bf16.mxu0 0
        %1687 = vmatpush1.bf16.msra.mxu0 0
        %1688 = vmatprep.subr.bf16.mxu0 0
        %1689 = vmatpush1.bf16.msra.mxu0 0
        %1690 = vmatprep.subr.bf16.mxu0 0
        %1691 = vmatpush1.bf16.msra.mxu0 0
        %1692 = vmatprep.subr.bf16.mxu0 0
        %1693 = vmatpush1.bf16.msra.mxu0 0
        %1694 = vmatprep.subr.bf16.mxu0 0
        %1695 = vmatpush1.bf16.msra.mxu0 0
        %1696 = vmatprep.subr.bf16.mxu0 0
        %1697 = vmatpush1.bf16.msra.mxu0 0
        %1698 = vmatprep.subr.bf16.mxu0 0
        %1699 = vmatpush1.bf16.msra.mxu0 0
        %1700 = vmatprep.subr.bf16.mxu0 0
        %1701 = vmatpush1.bf16.msra.mxu0 0
        %1702 = vmatprep.mubr.bf16.mxu0 0
        %1703 = vmatmul.mubr.bf16.gmra.mrb[0].mxu0 %v1664
        %v1704 = vpop.f32.mrb[0].mxu0
        %v1705 = vadd.f32 0.0, %v1704
        %v1706 = vpop.f32.mrb[0].mxu0
        %v1707 = vpop.f32.mrb[0].mxu0
        %v1708 = vpop.f32.mrb[0].mxu0
        %1709 = vdwg.mxu0
        %1710 = vrot.lane.b32.xlu0 %v1533, 96
        %v1711 = vpop.permute.xlu0 %1710
        %v1713 = vsel %vm1662, %v1659, 0
        %v1716 = vsel %vm1666, %v1711, 0
        %1718 = vmatprep.subr.bf16.mxu0 0
        %1719 = vmatpush1.bf16.msra.mxu0 %v1716
        %1720 = vmatprep.subr.bf16.mxu0 0
        %1721 = vmatpush1.bf16.msra.mxu0 0
        %1722 = vmatprep.subr.bf16.mxu0 0
        %1723 = vmatpush1.bf16.msra.mxu0 0
        %1724 = vmatprep.subr.bf16.mxu0 0
        %1725 = vmatpush1.bf16.msra.mxu0 0
        %1726 = vmatprep.subr.bf16.mxu0 0
        %1727 = vmatpush1.bf16.msra.mxu0 0
        %1728 = vmatprep.subr.bf16.mxu0 0
        %1729 = vmatpush1.bf16.msra.mxu0 0
        %1730 = vmatprep.subr.bf16.mxu0 0
        %1731 = vmatpush1.bf16.msra.mxu0 0
        %1732 = vmatprep.subr.bf16.mxu0 0
        %1733 = vmatpush1.bf16.msra.mxu0 0
        %1734 = vmatprep.subr.bf16.mxu0 0
        %1735 = vmatpush1.bf16.msra.mxu0 0
        %1736 = vmatprep.subr.bf16.mxu0 0
        %1737 = vmatpush1.bf16.msra.mxu0 0
        %1738 = vmatprep.subr.bf16.mxu0 0
        %1739 = vmatpush1.bf16.msra.mxu0 0
        %1740 = vmatprep.subr.bf16.mxu0 0
        %1741 = vmatpush1.bf16.msra.mxu0 0
        %1742 = vmatprep.subr.bf16.mxu0 0
        %1743 = vmatpush1.bf16.msra.mxu0 0
        %1744 = vmatprep.subr.bf16.mxu0 0
        %1745 = vmatpush1.bf16.msra.mxu0 0
        %1746 = vmatprep.subr.bf16.mxu0 0
        %1747 = vmatpush1.bf16.msra.mxu0 0
        %1748 = vmatprep.subr.bf16.mxu0 0
        %1749 = vmatpush1.bf16.msra.mxu0 0
        %1750 = vmatprep.mubr.bf16.mxu0 0
        %1751 = vmatmul.mubr.bf16.gmra.mrb[0].mxu0 %v1713
        %v1752 = vpop.f32.mrb[0].mxu0
        %v1753 = vadd.f32 0.0, %v1752
        %v1754 = vpop.f32.mrb[0].mxu0
        %v1755 = vpop.f32.mrb[0].mxu0
        %v1756 = vpop.f32.mrb[0].mxu0
        %1757 = vdwg.mxu0
        %v1758 = vpack.c.bf16 %v1705, %v1705
        %v1759 = vpack.c.bf16 %v1753, %v1753
        %v1760 = vld [vmem:[%s815] sm:$0xf]
        %v1761 = vld [vmem:[%s815 + $0x4] sm:$0xf]
        %v1762 = vld [vmem:[%s815 + $0x8] sm:$0xf]
        %v1763 = vld [vmem:[%s815 + $0xc] sm:$0xf]
        %v1766 = vunpack.c.l.b16 %v1760
        %v1767 = vunpack.c.l.b16 %v1761
        %v1768 = vpack.c.b16 %v1767, %v1766
        %v1771 = vsel %vm1537, %v1758, 0
        %1773 = vmatprep.subr.bf16.mxu0 0
        %1774 = vmatpush1.bf16.msra.mxu0 %v1768
        %1775 = vmatprep.subr.bf16.mxu0 0
        %1776 = vmatpush1.bf16.msra.mxu0 0
        %1777 = vmatprep.subr.bf16.mxu0 0
        %1778 = vmatpush1.bf16.msra.mxu0 0
        %1779 = vmatprep.subr.bf16.mxu0 0
        %1780 = vmatpush1.bf16.msra.mxu0 0
        %1781 = vmatprep.subr.bf16.mxu0 0
        %1782 = vmatpush1.bf16.msra.mxu0 0
        %1783 = vmatprep.subr.bf16.mxu0 0
        %1784 = vmatpush1.bf16.msra.mxu0 0
        %1785 = vmatprep.subr.bf16.mxu0 0
        %1786 = vmatpush1.bf16.msra.mxu0 0
        %1787 = vmatprep.subr.bf16.mxu0 0
        %1788 = vmatpush1.bf16.msra.mxu0 0
        %1789 = vmatprep.subr.bf16.mxu0 0
        %1790 = vmatpush1.bf16.msra.mxu0 0
        %1791 = vmatprep.subr.bf16.mxu0 0
        %1792 = vmatpush1.bf16.msra.mxu0 0
        %1793 = vmatprep.subr.bf16.mxu0 0
        %1794 = vmatpush1.bf16.msra.mxu0 0
        %1795 = vmatprep.subr.bf16.mxu0 0
        %1796 = vmatpush1.bf16.msra.mxu0 0
        %1797 = vmatprep.subr.bf16.mxu0 0
        %1798 = vmatpush1.bf16.msra.mxu0 0
        %1799 = vmatprep.subr.bf16.mxu0 0
        %1800 = vmatpush1.bf16.msra.mxu0 0
        %1801 = vmatprep.subr.bf16.mxu0 0
        %1802 = vmatpush1.bf16.msra.mxu0 0
        %1803 = vmatprep.subr.bf16.mxu0 0
        %1804 = vmatpush1.bf16.msra.mxu0 0
        %1805 = vmatprep.mubr.bf16.mxu0 0
        %1806 = vmatmul.mubr.bf16.gmra.mrb[0].mxu0 %v1771
        %v1807 = vpop.f32.mrb[0].mxu0
        %v1808 = vadd.f32 0.0, %v1807
        %v1809 = vpop.f32.mrb[0].mxu0
        %v1810 = vpop.f32.mrb[0].mxu0
        %v1811 = vpop.f32.mrb[0].mxu0
        %1812 = vdwg.mxu0
        %v1815 = vunpack.c.l.b16 %v1762
        %v1816 = vunpack.c.l.b16 %v1763
        %v1817 = vpack.c.b16 %v1816, %v1815
        %v1820 = vsel %vm1537, %v1759, 0
        %1822 = vmatprep.subr.bf16.mxu0 0
        %1823 = vmatpush1.bf16.msra.mxu0 %v1817
        %1824 = vmatprep.subr.bf16.mxu0 0
        %1825 = vmatpush1.bf16.msra.mxu0 0
        %1826 = vmatprep.subr.bf16.mxu0 0
        %1827 = vmatpush1.bf16.msra.mxu0 0
        %1828 = vmatprep.subr.bf16.mxu0 0
        %1829 = vmatpush1.bf16.msra.mxu0 0
        %1830 = vmatprep.subr.bf16.mxu0 0
        %1831 = vmatpush1.bf16.msra.mxu0 0
        %1832 = vmatprep.subr.bf16.mxu0 0
        %1833 = vmatpush1.bf16.msra.mxu0 0
        %1834 = vmatprep.subr.bf16.mxu0 0
        %1835 = vmatpush1.bf16.msra.mxu0 0
        %1836 = vmatprep.subr.bf16.mxu0 0
        %1837 = vmatpush1.bf16.msra.mxu0 0
        %1838 = vmatprep.subr.bf16.mxu0 0
        %1839 = vmatpush1.bf16.msra.mxu0 0
        %1840 = vmatprep.subr.bf16.mxu0 0
        %1841 = vmatpush1.bf16.msra.mxu0 0
        %1842 = vmatprep.subr.bf16.mxu0 0
        %1843 = vmatpush1.bf16.msra.mxu0 0
        %1844 = vmatprep.subr.bf16.mxu0 0
        %1845 = vmatpush1.bf16.msra.mxu0 0
        %1846 = vmatprep.subr.bf16.mxu0 0
        %1847 = vmatpush1.bf16.msra.mxu0 0
        %1848 = vmatprep.subr.bf16.mxu0 0
        %1849 = vmatpush1.bf16.msra.mxu0 0
        %1850 = vmatprep.subr.bf16.mxu0 0
        %1851 = vmatpush1.bf16.msra.mxu0 0
        %1852 = vmatprep.subr.bf16.mxu0 0
        %1853 = vmatpush1.bf16.msra.mxu0 0
        %1854 = vmatprep.mubr.bf16.mxu0 0
        %1855 = vmatmul.mubr.bf16.gmra.mrb[0].mxu0 %v1820
        %v1856 = vpop.f32.mrb[0].mxu0
        %v1857 = vadd.f32 0.0, %v1856
        %v1858 = vpop.f32.mrb[0].mxu0
        %v1859 = vpop.f32.mrb[0].mxu0
        %v1860 = vpop.f32.mrb[0].mxu0
        %1861 = vdwg.mxu0
        %v1862 = vsel %vm1372, %v1808, 0.0
        %v1863 = vsel %vm1372, %v1857, 0.0
        %v1864 = vadd.f32 %v1862, %v1863
        %v1865 = vadd.f32 %v1369, %v1864
        %v1866 = vld [vmem:[%s818] sm:$0x1]
        %v1868 = vlaneseq
        %v1869 = vshrl.u32 %v1868, 7
        %v1870 = vsub.s32 0, %v1869
        %v1871 = vrot.slane %v1866, %v1870
        %v1873 = vadd.f32 %v1865, %v1871
        %v1874 = vld [vmem:[%s821] sm:$0x1]
        %v1875 = vld [vmem:[%s824] sm:$0x1]
        %v1876 = vsel %vm1372, %v1873, 0.0
        %1877 = vadd.xlane.f32.xlu0 %v1876
        %v1878 = vpop.xlane.xlu0 %1877
        %v1879 = vmul.f32 %v1878, %v1376
        %v1880 = vsub.f32 %v1873, %v1879
        %v1881 = vmul.f32 %v1880, %v1880
        %v1882 = vsel %vm1372, %v1881, 0.0
        %1883 = vadd.xlane.f32.xlu0 %v1882
        %v1884 = vpop.xlane.xlu0 %1883
        %v1885 = vmul.f32 %v1884, %v1376
        %v1886 = vadd.f32 %v1885, 1e-12
        %v1887 = vrsqrt.pop %v1886
        %v1888 = vmul.f32 %v1880, %v1887
        %v1890 = vlaneseq
        %v1891 = vshrl.u32 %v1890, 7
        %v1892 = vsub.s32 0, %v1891
        %v1893 = vrot.slane %v1874, %v1892
        %v1895 = vmul.f32 %v1888, %v1893
        %v1897 = vlaneseq
        %v1898 = vshrl.u32 %v1897, 7
        %v1899 = vsub.s32 0, %v1898
        %v1900 = vrot.slane %v1875, %v1899
        %v1902 = vadd.f32 %v1895, %v1900
        %v1903 = vpack.c.bf16 %v1902, %v1902
        %v1904 = vld [vmem:[%s829] sm:$0xf]
        %v1905 = vld [vmem:[%s829 + $0x4] sm:$0xf]
        %v1906 = vld [vmem:[%s829 + $0x8] sm:$0xf]
        %v1907 = vld [vmem:[%s829 + $0xc] sm:$0xf]
        %v1908 = vld [vmem:[%s832] sm:$0x1]
        %v1910 = vlaneseq
        %v1911 = vshrl.u32 %v1910, 7
        %v1912 = vsub.s32 0, %v1911
        %v1913 = vrot.slane %v1908, %v1912
        %v1919 = vunpack.c.l.b16 %v1904
        %v1920 = vunpack.c.l.b16 %v1905
        %v1921 = vunpack.c.l.b16 %v1906
        %v1922 = vunpack.c.l.b16 %v1907
        %v1923 = vpack.c.b16 %v1920, %v1919
        %v1924 = vpack.c.b16 %v1922, %v1921
        %v1928 = vsel %vm1436, %v1903, 0
        %1930 = vmatprep.subr.bf16.mxu0 0
        %1931 = vmatpush1.bf16.msra.mxu0 %v1923
        %1932 = vmatprep.subr.bf16.mxu0 0
        %1933 = vmatpush1.bf16.msra.mxu0 %v1924
        %1934 = vmatprep.subr.bf16.mxu0 0
        %1935 = vmatpush1.bf16.msra.mxu0 0
        %1936 = vmatprep.subr.bf16.mxu0 0
        %1937 = vmatpush1.bf16.msra.mxu0 0
        %1938 = vmatprep.subr.bf16.mxu0 0
        %1939 = vmatpush1.bf16.msra.mxu0 0
        %1940 = vmatprep.subr.bf16.mxu0 0
        %1941 = vmatpush1.bf16.msra.mxu0 0
        %1942 = vmatprep.subr.bf16.mxu0 0
        %1943 = vmatpush1.bf16.msra.mxu0 0
        %1944 = vmatprep.subr.bf16.mxu0 0
        %1945 = vmatpush1.bf16.msra.mxu0 0
        %1946 = vmatprep.subr.bf16.mxu0 0
        %1947 = vmatpush1.bf16.msra.mxu0 0
        %1948 = vmatprep.subr.bf16.mxu0 0
        %1949 = vmatpush1.bf16.msra.mxu0 0
        %1950 = vmatprep.subr.bf16.mxu0 0
        %1951 = vmatpush1.bf16.msra.mxu0 0
        %1952 = vmatprep.subr.bf16.mxu0 0
        %1953 = vmatpush1.bf16.msra.mxu0 0
        %1954 = vmatprep.subr.bf16.mxu0 0
        %1955 = vmatpush1.bf16.msra.mxu0 0
        %1956 = vmatprep.subr.bf16.mxu0 0
        %1957 = vmatpush1.bf16.msra.mxu0 0
        %1958 = vmatprep.subr.bf16.mxu0 0
        %1959 = vmatpush1.bf16.msra.mxu0 0
        %1960 = vmatprep.subr.bf16.mxu0 0
        %1961 = vmatpush1.bf16.msra.mxu0 0
        %1962 = vmatprep.mubr.bf16.mxu0 0
        %1963 = vmatmul.mubr.bf16.gmra.mrb[0].mxu0 %v1928
        %v1964 = vpop.f32.mrb[0].mxu0
        %v1965 = vadd.f32 %v1913, %v1964
        %v1966 = vpop.f32.mrb[0].mxu0
        %v1967 = vpop.f32.mrb[0].mxu0
        %v1968 = vpop.f32.mrb[0].mxu0
        %1969 = vdwg.mxu0
        %v1970 = vmul.f32 %v1965, %v1965
        %v1971 = vmul.f32 %v1965, %v1970
        %v1972 = vmul.f32 %v1971, 0.044715
        %v1973 = vadd.f32 %v1965, %v1972
        %v1974 = vmul.f32 %v1973, 0.7978846
        %v1975 = vtanh.pop %v1974
        %v1976 = vadd.f32 %v1975, 1.0
        %v1977 = vmul.f32 %v1976, 0.5
        %v1978 = vmul.f32 %v1965, %v1977
        %v1979 = vpack.c.bf16 %v1978, %v1978
        %v1980 = vld [vmem:[%s837] sm:$0xf]
        %v1981 = vld [vmem:[%s837 + $0x4] sm:$0xf]
        %v1982 = vld [vmem:[%s837 + $0x8] sm:$0xf]
        %v1983 = vld [vmem:[%s837 + $0xc] sm:$0xf]
        %v1984 = vld [vmem:[%s837 + $0x10] sm:$0xf]
        %v1985 = vld [vmem:[%s837 + $0x14] sm:$0xf]
        %v1986 = vld [vmem:[%s837 + $0x18] sm:$0xf]
        %v1987 = vld [vmem:[%s837 + $0x1c] sm:$0xf]
        %v1988 = vld [vmem:[%s840] sm:$0x1]
        %v1990 = vlaneseq
        %v1991 = vshrl.u32 %v1990, 7
        %v1992 = vsub.s32 0, %v1991
        %v1993 = vrot.slane %v1988, %v1992
        %v2003 = vunpack.c.l.b16 %v1980
        %v2004 = vunpack.c.l.b16 %v1981
        %v2005 = vunpack.c.l.b16 %v1982
        %v2006 = vunpack.c.l.b16 %v1983
        %v2007 = vunpack.c.l.b16 %v1984
        %v2008 = vunpack.c.l.b16 %v1985
        %v2009 = vunpack.c.l.b16 %v1986
        %v2010 = vunpack.c.l.b16 %v1987
        %v2011 = vpack.c.b16 %v2004, %v2003
        %v2012 = vpack.c.b16 %v2006, %v2005
        %v2013 = vpack.c.b16 %v2008, %v2007
        %v2014 = vpack.c.b16 %v2010, %v2009
        %vm2019 = vcmask 523264
        %v2021 = vsel %vm2019, %v1979, 0
        %2023 = vmatprep.subr.bf16.mxu0 0
        %2024 = vmatpush1.bf16.msra.mxu0 %v2011
        %2025 = vmatprep.subr.bf16.mxu0 0
        %2026 = vmatpush1.bf16.msra.mxu0 %v2012
        %2027 = vmatprep.subr.bf16.mxu0 0
        %2028 = vmatpush1.bf16.msra.mxu0 %v2013
        %2029 = vmatprep.subr.bf16.mxu0 0
        %2030 = vmatpush1.bf16.msra.mxu0 %v2014
        %2031 = vmatprep.subr.bf16.mxu0 0
        %2032 = vmatpush1.bf16.msra.mxu0 0
        %2033 = vmatprep.subr.bf16.mxu0 0
        %2034 = vmatpush1.bf16.msra.mxu0 0
        %2035 = vmatprep.subr.bf16.mxu0 0
        %2036 = vmatpush1.bf16.msra.mxu0 0
        %2037 = vmatprep.subr.bf16.mxu0 0
        %2038 = vmatpush1.bf16.msra.mxu0 0
        %2039 = vmatprep.subr.bf16.mxu0 0
        %2040 = vmatpush1.bf16.msra.mxu0 0
        %2041 = vmatprep.subr.bf16.mxu0 0
        %2042 = vmatpush1.bf16.msra.mxu0 0
        %2043 = vmatprep.subr.bf16.mxu0 0
        %2044 = vmatpush1.bf16.msra.mxu0 0
        %2045 = vmatprep.subr.bf16.mxu0 0
        %2046 = vmatpush1.bf16.msra.mxu0 0
        %2047 = vmatprep.subr.bf16.mxu0 0
        %2048 = vmatpush1.bf16.msra.mxu0 0
        %2049 = vmatprep.subr.bf16.mxu0 0
        %2050 = vmatpush1.bf16.msra.mxu0 0
        %2051 = vmatprep.subr.bf16.mxu0 0
        %2052 = vmatpush1.bf16.msra.mxu0 0
        %2053 = vmatprep.subr.bf16.mxu0 0
        %2054 = vmatpush1.bf16.msra.mxu0 0
        %2055 = vmatprep.mubr.bf16.mxu0 0
        %2056 = vmatmul.mubr.bf16.gmra.mrb[0].mxu0 %v2021
        %v2057 = vpop.f32.mrb[0].mxu0
        %v2058 = vadd.f32 %v1993, %v2057
        %v2059 = vpop.f32.mrb[0].mxu0
        %v2060 = vpop.f32.mrb[0].mxu0
        %v2061 = vpop.f32.mrb[0].mxu0
        %2062 = vdwg.mxu0
        %v2063 = vadd.f32 %v1873, %v2058
        %2064 = vst.msk [vmem:[#allocation2] sm:$0x3f] %vm1372, %v2063
        %p2065 = scmp.eq.s32.totalorder %s40, 1
        // Predicated region
        $region101: #{_lambda_.1} parent=95 // pred_check
          %p2066 = pneg %p2065
        $region102: #{_lambda_.1} parent=95 // pred_check_branch
          %2068 = sbr.rel (%p2066) target = $region104
        $region103: #{_lambda_.1} parent=95 // pred_region
          %v2069 = vld [vmem:[%s15] sm:$0x1]
          %v2070 = vld [vmem:[%s16] sm:$0x1]
          %v2071 = vsel %vm1372, %v2063, 0.0
          %2072 = vadd.xlane.f32.xlu0 %v2071
          %v2073 = vpop.xlane.xlu0 %2072
          %v2074 = vmul.f32 %v2073, %v1376
          %v2075 = vsub.f32 %v2063, %v2074
          %v2076 = vmul.f32 %v2075, %v2075
          %v2077 = vsel %vm1372, %v2076, 0.0
          %2078 = vadd.xlane.f32.xlu0 %v2077
          %v2079 = vpop.xlane.xlu0 %2078
          %v2080 = vmul.f32 %v2079, %v1376
          %v2081 = vadd.f32 %v2080, 1e-12
          %v2082 = vrsqrt.pop %v2081
          %v2083 = vmul.f32 %v2075, %v2082
          %v2085 = vlaneseq
          %v2086 = vshrl.u32 %v2085, 7
          %v2087 = vsub.s32 0, %v2086
          %v2088 = vrot.slane %v2069, %v2087
          %v2090 = vmul.f32 %v2083, %v2088
          %v2092 = vlaneseq
          %v2093 = vshrl.u32 %v2092, 7
          %v2094 = vsub.s32 0, %v2093
          %v2095 = vrot.slane %v2070, %v2094
          %v2097 = vadd.f32 %v2090, %v2095
          %2098 = vst.msk [vmem:[%s844] sm:$0x3f] %vm1372, %v2097
          %v2099 = vpack.c.bf16 %v2097, %v2097
          %v2100 = vld [vmem:[%s17] sm:$0xf]
          %v2101 = vld [vmem:[%s17 + $0x4] sm:$0xf]
          %v2102 = vld [vmem:[%s17 + $0x8] sm:$0xf]
          %v2103 = vld [vmem:[%s17 + $0xc] sm:$0xf]
          %v2104 = vld [vmem:[%s18] sm:$0x1]
          %v2109 = vunpack.c.l.b16 %v2100
          %v2110 = vunpack.c.l.b16 %v2101
          %v2111 = vunpack.c.l.b16 %v2102
          %v2112 = vunpack.c.l.b16 %v2103
          %v2113 = vpack.c.b16 %v2110, %v2109
          %v2114 = vpack.c.b16 %v2112, %v2111
          %v2118 = vsel %vm1436, %v2099, 0
          %2120 = vmatprep.subr.bf16.mxu0 0
          %2121 = vmatpush1.bf16.msra.mxu0 %v2113
          %2122 = vmatprep.subr.bf16.mxu0 0
          %2123 = vmatpush1.bf16.msra.mxu0 %v2114
          %2124 = vmatprep.subr.bf16.mxu0 0
          %2125 = vmatpush1.bf16.msra.mxu0 0
          %2126 = vmatprep.subr.bf16.mxu0 0
          %2127 = vmatpush1.bf16.msra.mxu0 0
          %2128 = vmatprep.subr.bf16.mxu0 0
          %2129 = vmatpush1.bf16.msra.mxu0 0
          %2130 = vmatprep.subr.bf16.mxu0 0
          %2131 = vmatpush1.bf16.msra.mxu0 0
          %2132 = vmatprep.subr.bf16.mxu0 0
          %2133 = vmatpush1.bf16.msra.mxu0 0
          %2134 = vmatprep.subr.bf16.mxu0 0
          %2135 = vmatpush1.bf16.msra.mxu0 0
          %2136 = vmatprep.subr.bf16.mxu0 0
          %2137 = vmatpush1.bf16.msra.mxu0 0
          %2138 = vmatprep.subr.bf16.mxu0 0
          %2139 = vmatpush1.bf16.msra.mxu0 0
          %2140 = vmatprep.subr.bf16.mxu0 0
          %2141 = vmatpush1.bf16.msra.mxu0 0
          %2142 = vmatprep.subr.bf16.mxu0 0
          %2143 = vmatpush1.bf16.msra.mxu0 0
          %2144 = vmatprep.subr.bf16.mxu0 0
          %2145 = vmatpush1.bf16.msra.mxu0 0
          %2146 = vmatprep.subr.bf16.mxu0 0
          %2147 = vmatpush1.bf16.msra.mxu0 0
          %2148 = vmatprep.subr.bf16.mxu0 0
          %2149 = vmatpush1.bf16.msra.mxu0 0
          %2150 = vmatprep.subr.bf16.mxu0 0
          %2151 = vmatpush1.bf16.msra.mxu0 0
          %2152 = vmatprep.mubr.bf16.mxu0 0
          %2153 = vmatmul.mubr.bf16.gmra.mrb[0].mxu0 %v2118
          %v2154 = vpop.f32.mrb[0].mxu0
          %v2155 = vadd.f32 %v2104, %v2154
          %v2156 = vpop.f32.mrb[0].mxu0
          %v2157 = vpop.f32.mrb[0].mxu0
          %v2158 = vpop.f32.mrb[0].mxu0
          %2159 = vdwg.mxu0
          %vm2160 = vcmask 32768
          %2161 = vst.msk [vmem:[%s784] sm:$0x1] %vm2160, %v2155
        $region104: #{_lambda_.1} parent=95 // pred_fallthru
          _
        %s2162 = sand.u32 %s519, 1
        %s2163 = scalar_lea.sflag [#allocation4], %s2162
        %s2164 = sand.u32 %s519, 1
        %s2165 = scalar_lea.vmem [#allocation3], %s2164
        %p2166 = scmp.lt.s32.totalorder %s39, 1
        %s2167 = scalar_select %p2166, %s39, 1
        %s2168 = smul.addr %s2167, 8
        %s2169 = scalar_lea.vmem %s20, %s2168
        // Predicated region
        $region105: #{_lambda_.1} parent=95 // pred_check
          %p2170 = pneg %p529
        $region106: #{_lambda_.1} parent=95 // pred_check_branch
          %2172 = sbr.rel (%p2170) target = $region108
        $region107: #{_lambda_.1} parent=95 // pred_region
          %s2174 = ssub.s32 16, 16
          %2175 = vsyncadd %s2163, %s2174
          %s2176 = smul.addr %s39, 16
          %s2177 = scalar_lea.hbm %s19, %s2176
          %s2179 = sshll.u32 %s2165, 4
          %s2180 = int_to_ptr.vmem [resolvable:$true] %s2179
          %2182 = dma.vmem_to_hbm [thread:$0]  %s2180, 16, %s2177, %s2163
        $region108: #{_lambda_.1} parent=95 // pred_fallthru
          _
        // Predicated region
        $region109: #{_lambda_.1} parent=95 // pred_check
          %p2183 = pneg %p555
        $region110: #{_lambda_.1} parent=95 // pred_check_branch
          %2185 = sbr.rel (%p2183) target = $region112
        $region111: #{_lambda_.1} parent=95 // pred_region
          _
        $region112: #{_lambda_.1} parent=95 // pred_fallthru
          _
      $region96: #{_lambda_.1} parent=5 // pred_fallthru
        _
      %p2186 = scmp.le.s32.totalorder 2, %s30
      // Predicated region
      $region113: #{_lambda_.1} parent=5 // pred_check
        %p2187 = pneg %p2186
      $region114: #{_lambda_.1} parent=5 // pred_check_branch
        %2189 = sbr.rel (%p2187) target = $region116
      $region115: #{_lambda_.1} parent=5 // pred_region
        %s2190 = ssub.s32 %s30, 2
        // Predicated region
        $region117: #{_lambda_.1} parent=115 // pred_check
          %p2191 = pneg %p535
        $region118: #{_lambda_.1} parent=115 // pred_check_branch
          %2193 = sbr.rel (%p2191) target = $region120
        $region119: #{_lambda_.1} parent=115 // pred_region
          %s2194 = sand.u32 %s520, 1
          %s2195 = scalar_lea.sflag [#allocation4], %s2194
          %s2196 = sand.u32 %s520, 1
          %s2197 = scalar_lea.vmem [#allocation3], %s2196
          %2198 = dma.done %s2195, 16
        $region120: #{_lambda_.1} parent=115 // pred_fallthru
          _
        // Predicated region
        $region121: #{_lambda_.1} parent=115 // pred_check
          %p2199 = pneg %p561
        $region122: #{_lambda_.1} parent=115 // pred_check_branch
          %2201 = sbr.rel (%p2199) target = $region124
        $region123: #{_lambda_.1} parent=115 // pred_region
          %p2202 = scmp.lt.s32.totalorder %s41, 1
          %s2203 = scalar_select %p2202, %s41, 1
          %s2204 = smul.addr %s2203, 8
          %s2205 = scalar_lea.vmem %s20, %s2204
        $region124: #{_lambda_.1} parent=115 // pred_fallthru
          _
      $region116: #{_lambda_.1} parent=5 // pred_fallthru
        _
    $region6: #{_lambda_.1} parent=1 // loop_footer
      %s34 = sadd.s32 1, %s30
    $region7: #{_lambda_.1} parent=1 // loop_footer_branch
      %29 = sbr.rel target = $region3
    $region8: #{_lambda_.1} parent=1 // loop_exit
      _
    %2206 = vsyncpa [#allocation4], 1
    %s2207 = scalar_lea.sflag [#allocation4], 1
    %2208 = vsyncpa %s2207, 1

</llo_original>
